<compile_context>
chip_gen: v7x
topology: tpu7x:2x2x1
jax: 0.10.0
libtpu: 0.0.40
codegen_flags: <defaults>
</compile_context>

<pallas_src>
import jax
import jax.numpy as jnp
from jax import lax
from jax.experimental import pallas as pl
from jax.experimental.pallas import tpu as pltpu

_NUM_ANCHORS = 3


# ----------------------------- Pallas kernel ------------------------------- #

def _make_kernel(scale_meta, C):
    """scale_meta: tuple of (HW, W, stride, ((aw0,ah0),(aw1,ah1),(aw2,ah2)))."""
    A = _NUM_ANCHORS
    n_scales = len(scale_meta)

    def kernel(*refs):
        x_refs, o_refs = refs[:n_scales], refs[n_scales:]
        for (hw, w, stride, anc), x_ref, o_ref in zip(scale_meta, x_refs, o_refs):
            wf = float(w)

            # Whole channel-major block for this (batch, scale): channels on
            # sublanes, cells on lanes.  Single load + single (no-op for f32)
            # upcast.
            X = x_ref[0].astype(jnp.float32)                     # (3*C, HW)

            # Grid-cell offsets: one lane iota per scale, shared by all three
            # anchors.  (+0.5 keeps floor(cell/W) exact for any W.)
            cell = lax.broadcasted_iota(jnp.int32, (1, hw), 1).astype(jnp.float32)
            gy = jnp.floor((cell + 0.5) / wf)                    # (1, HW)
            gx = cell - gy * wf                                  # (1, HW)

            bx, by, bw, bh, conf, cls = [], [], [], [], [], []
            for a in range(A):
                base = a * C
                # Lane-dense row-slab transcendentals, only where needed.
                sxy = jax.nn.sigmoid(X[base:base + 2, :])        # (2, HW)
                ewh = jnp.exp(X[base + 2:base + 4, :])           # (2, HW)
                srest = jax.nn.sigmoid(X[base + 4:base + C, :])  # (1+nc, HW)

                bx.append((sxy[0:1, :] + gx) * stride)
                by.append((sxy[1:2, :] + gy) * stride)
                bw.append(ewh[0:1, :] * anc[a][0])
                bh.append(ewh[1:2, :] * anc[a][1])
                conf.append(srest[0:1, :])
                if C > 5:
                    cls.append(srest[1:, :])                     # (nc, HW)

            # Anchor fusion: pure elementwise over lane-dense slabs.
            maxc = jnp.maximum(jnp.maximum(conf[0], conf[1]), conf[2]) - 0.1
            f = [jnp.maximum(c - maxc, 0.0) for c in conf]
            inv_s = 1.0 / (f[0] + f[1] + f[2])       # s >= 0.1 always; one divide
            wgt = [fi * inv_s for fi in f]           # (1, HW) each

            def wsum(parts):
                return wgt[0] * parts[0] + wgt[1] * parts[1] + wgt[2] * parts[2]

            # Write each decoded quantity straight into its sublane row(s) of
            # the lane-dense (C, HW) output block -- no select chains.
            o_ref[0, 0:1, :] = wsum(bx)
            o_ref[0, 1:2, :] = wsum(by)
            o_ref[0, 2:3, :] = wsum(bw)
            o_ref[0, 3:4, :] = wsum(bh)
            o_ref[0, 4:5, :] = maxc + 0.1            # = max anchor confidence
            if C > 5:
                o_ref[0, 5:C, :] = wsum(cls)         # wgt broadcasts over rows

    return kernel


def _detect_all_scales(xs, scale_meta, C):
    """One pallas_call over all scales; xs[s]: (B, 3C, HW_s) channel-major."""
    A = _NUM_ANCHORS
    B = xs[0].shape[0]
    hws = [m[0] for m in scale_meta]
    kernel = _make_kernel(tuple(scale_meta), C)

    return pl.pallas_call(
        kernel,
        grid=(B,),
        in_specs=[pl.BlockSpec((1, A * C, hw), lambda b: (b, 0, 0)) for hw in hws],
        out_specs=[pl.BlockSpec((1, C, hw), lambda b: (b, 0, 0)) for hw in hws],
        out_shape=[jax.ShapeDtypeStruct((B, C, hw), jnp.float32) for hw in hws],
        compiler_params=pltpu.CompilerParams(
            dimension_semantics=("parallel",)),
    )(*xs)


# --------------------------------- Glue ------------------------------------ #

def detection_layer_forward(x, anchors, anchors_mask, input_wh, num_classes):
    """Forward of DetectionLayer. x = (l_data, m_data, h_data), NCHW conv maps."""
    A = _NUM_ANCHORS
    C = 5 + num_classes
    anchors = [(float(a[0]), float(a[1])) for a in anchors]

    B = x[0].shape[0]
    scale_meta, xs = [], []
    for data, mask in zip(x, anchors_mask):
        b, ch, H, W = data.shape
        assert b == B and ch == A * C
        stride = float(input_wh[0]) / float(W)
        anc = tuple(anchors[mask[0]:mask[-1] + 1])               # 3 x (w, h)
        scale_meta.append((H * W, W, stride, anc))
        # Native channel-major layout: a contiguous reshape, NOT a transpose.
        xs.append(data.reshape(B, A * C, H * W))

    outs = _detect_all_scales(xs, scale_meta, C)

    # Only remaining XLA layout work: concat + transpose of the 1/3-size fused
    # result into the module's (B, total_cells, C) output layout.
    out = jnp.concatenate(list(outs), axis=2)                    # (B, C, total)
    return jnp.transpose(out, (0, 2, 1))                         # (B, total, C)


# ----------------------- pure-JAX reference (check) ------------------------ #

def _reference_forward(x, anchors, anchors_mask, input_wh, num_classes):
    A, C = _NUM_ANCHORS, 5 + num_classes
    anchors = jnp.asarray(anchors, jnp.float32)
    decs = []
    for data, mask in zip(x, anchors_mask):
        B, _, H, W = data.shape
        stride = float(input_wh[0]) / float(W)
        # permute_sigmoid convention: (B, 3C, H, W) -> (B, H*W, 3, C)
        t = (data.astype(jnp.float32)
                 .reshape(B, A * C, H * W)
                 .transpose(0, 2, 1)
                 .reshape(B, H * W, A, C))
        gx = jnp.tile(jnp.arange(W, dtype=jnp.float32), H)       # x fastest
        gy = jnp.repeat(jnp.arange(H, dtype=jnp.float32), W)
        gxy = jnp.stack([gx, gy], axis=-1).reshape(1, H * W, 1, 2)
        an = anchors[mask[0]:mask[-1] + 1].reshape(1, 1, A, 2)
        xy = (jax.nn.sigmoid(t[..., 0:2]) + gxy) * stride
        wh = jnp.exp(t[..., 2:4]) * an
        rest = jax.nn.sigmoid(t[..., 4:])
        decs.append(jnp.concatenate([xy, wh, rest], -1).reshape(B, H * W * A, C))
    d = jnp.concatenate(decs, axis=1)
    total = d.shape[1] // A
    d = d.reshape(-1, total, A, C)
    maxconf = jnp.max(d[..., 4:5], axis=2, keepdims=True) - 0.1
    frac = jax.nn.relu(d[..., 4:5] - maxconf)
    frac = frac / jnp.sum(frac, axis=2, keepdims=True)
    out = jnp.sum(d * frac, axis=2)
    out = out.at[:, :, 4].set(maxconf[:, :, 0, 0] + 0.1)
    return out


# --------------------------------- Main ------------------------------------ #

if __name__ == "__main__":
    B, num_classes = 2, 3
    C = 5 + num_classes
    conv_ch = _NUM_ANCHORS * C           # 24 channels
    input_wh = (64, 64)

    key = jax.random.PRNGKey(0)
    k1, k2, k3 = jax.random.split(key, 3)
    l_data = jax.random.normal(k1, (B, conv_ch, 8, 8), jnp.float32)   # stride 8
    m_data = jax.random.normal(k2, (B, conv_ch, 4, 4), jnp.float32)   # stride 16
    h_data = jax.random.normal(k3, (B, conv_ch, 2, 2), jnp.float32)   # stride 32

    anchors = [[4., 6.], [8., 10.], [12., 16.],
               [16., 24.], [24., 32.], [32., 40.],
               [40., 48.], [48., 56.], [56., 60.]]
    anchors_mask = [[0, 1, 2], [3, 4, 5], [6, 7, 8]]

    x = (l_data, m_data, h_data)
    out = detection_layer_forward(x, anchors, anchors_mask, input_wh, num_classes)
    out = jax.block_until_ready(out)

    total_cells = 8 * 8 + 4 * 4 + 2 * 2
    assert out.shape == (B, total_cells, C), out.shape

    ref = _reference_forward(x, anchors, anchors_mask, input_wh, num_classes)
    assert jnp.allclose(out, ref, atol=1e-4, rtol=1e-4), "mismatch vs reference"

    print("KERNEL_OK")
</pallas_src>

<mosaic_0001>
module attributes {stable_mosaic.version = 11 : i64} {
  func.func @kernel(%arg0: i32, %arg1: memref<1x24x64xf32, #tpu.memory_space<vmem>>, %arg2: memref<1x24x16xf32, #tpu.memory_space<vmem>>, %arg3: memref<1x24x4xf32, #tpu.memory_space<vmem>>, %arg4: memref<1x8x64xf32, #tpu.memory_space<vmem>>, %arg5: memref<1x8x16xf32, #tpu.memory_space<vmem>>, %arg6: memref<1x8x4xf32, #tpu.memory_space<vmem>>) attributes {dimension_semantics = [#tpu.dimension_semantics<parallel>], iteration_bounds = array<i64: 2>, scalar_prefetch = 0 : i64, scratch_operands = 0 : i64, tpu.core_type = #tpu.core_type<tc>, window_params = [{transform_indices = @transform_0, window_bounds = array<i64: 1, 24, 64>}, {transform_indices = @transform_1, window_bounds = array<i64: 1, 24, 16>}, {transform_indices = @transform_2, window_bounds = array<i64: 1, 24, 4>}, {transform_indices = @transform_3, window_bounds = array<i64: 1, 8, 64>}, {transform_indices = @transform_4, window_bounds = array<i64: 1, 8, 16>}, {transform_indices = @transform_5, window_bounds = array<i64: 1, 8, 4>}]} {
    %c0 = arith.constant 0 : index
    %c0_0 = arith.constant 0 : index
    %c0_1 = arith.constant 0 : index
    %0 = vector.load %arg1[%c0, %c0_0, %c0_1] : memref<1x24x64xf32, #tpu.memory_space<vmem>>, vector<1x24x64xf32>
    %1 = vector.shape_cast %0 : vector<1x24x64xf32> to vector<24x64xf32>
    %2 = tpu.iota {dimensions = array<i32: 1>} : vector<1x64xi32>
    %3 = arith.sitofp %2 : vector<1x64xi32> to vector<1x64xf32>
    %cst = arith.constant 5.000000e-01 : f32
    %4 = vector.broadcast %cst : f32 to vector<1x64xf32>
    %5 = arith.addf %3, %4 : vector<1x64xf32>
    %cst_2 = arith.constant 8.000000e+00 : f32
    %6 = vector.broadcast %cst_2 : f32 to vector<1x64xf32>
    %7 = arith.divf %5, %6 : vector<1x64xf32>
    %8 = math.floor %7 : vector<1x64xf32>
    %cst_3 = arith.constant 8.000000e+00 : f32
    %9 = vector.broadcast %cst_3 : f32 to vector<1x64xf32>
    %10 = arith.mulf %8, %9 : vector<1x64xf32>
    %11 = arith.subf %3, %10 : vector<1x64xf32>
    %12 = vector.extract_strided_slice %1 {offsets = [0, 0], sizes = [2, 64], strides = [1, 1]} : vector<24x64xf32> to vector<2x64xf32>
    %13 = arith.negf %12 : vector<2x64xf32>
    %14 = math.exp %13 : vector<2x64xf32>
    %cst_4 = arith.constant 1.000000e+00 : f32
    %15 = vector.broadcast %cst_4 : f32 to vector<2x64xf32>
    %16 = arith.addf %15, %14 : vector<2x64xf32>
    %17 = arith.divf %15, %16 : vector<2x64xf32>
    %18 = vector.extract_strided_slice %1 {offsets = [2, 0], sizes = [2, 64], strides = [1, 1]} : vector<24x64xf32> to vector<2x64xf32>
    %19 = math.exp %18 : vector<2x64xf32>
    %20 = vector.extract_strided_slice %1 {offsets = [4, 0], sizes = [4, 64], strides = [1, 1]} : vector<24x64xf32> to vector<4x64xf32>
    %21 = arith.negf %20 : vector<4x64xf32>
    %22 = math.exp %21 : vector<4x64xf32>
    %cst_5 = arith.constant 1.000000e+00 : f32
    %23 = vector.broadcast %cst_5 : f32 to vector<4x64xf32>
    %24 = arith.addf %23, %22 : vector<4x64xf32>
    %25 = arith.divf %23, %24 : vector<4x64xf32>
    %26 = vector.extract_strided_slice %17 {offsets = [0, 0], sizes = [1, 64], strides = [1, 1]} : vector<2x64xf32> to vector<1x64xf32>
    %27 = arith.addf %26, %11 : vector<1x64xf32>
    %cst_6 = arith.constant 8.000000e+00 : f32
    %28 = vector.broadcast %cst_6 : f32 to vector<1x64xf32>
    %29 = arith.mulf %27, %28 : vector<1x64xf32>
    %30 = vector.extract_strided_slice %17 {offsets = [1, 0], sizes = [1, 64], strides = [1, 1]} : vector<2x64xf32> to vector<1x64xf32>
    %31 = arith.addf %30, %8 : vector<1x64xf32>
    %cst_7 = arith.constant 8.000000e+00 : f32
    %32 = vector.broadcast %cst_7 : f32 to vector<1x64xf32>
    %33 = arith.mulf %31, %32 : vector<1x64xf32>
    %34 = vector.extract_strided_slice %19 {offsets = [0, 0], sizes = [1, 64], strides = [1, 1]} : vector<2x64xf32> to vector<1x64xf32>
    %cst_8 = arith.constant 4.000000e+00 : f32
    %35 = vector.broadcast %cst_8 : f32 to vector<1x64xf32>
    %36 = arith.mulf %34, %35 : vector<1x64xf32>
    %37 = vector.extract_strided_slice %19 {offsets = [1, 0], sizes = [1, 64], strides = [1, 1]} : vector<2x64xf32> to vector<1x64xf32>
    %cst_9 = arith.constant 6.000000e+00 : f32
    %38 = vector.broadcast %cst_9 : f32 to vector<1x64xf32>
    %39 = arith.mulf %37, %38 : vector<1x64xf32>
    %40 = vector.extract_strided_slice %25 {offsets = [0, 0], sizes = [1, 64], strides = [1, 1]} : vector<4x64xf32> to vector<1x64xf32>
    %41 = vector.extract_strided_slice %25 {offsets = [1, 0], sizes = [3, 64], strides = [1, 1]} : vector<4x64xf32> to vector<3x64xf32>
    %42 = vector.extract_strided_slice %1 {offsets = [8, 0], sizes = [2, 64], strides = [1, 1]} : vector<24x64xf32> to vector<2x64xf32>
    %43 = arith.negf %42 : vector<2x64xf32>
    %44 = math.exp %43 : vector<2x64xf32>
    %cst_10 = arith.constant 1.000000e+00 : f32
    %45 = vector.broadcast %cst_10 : f32 to vector<2x64xf32>
    %46 = arith.addf %45, %44 : vector<2x64xf32>
    %47 = arith.divf %45, %46 : vector<2x64xf32>
    %48 = vector.extract_strided_slice %1 {offsets = [10, 0], sizes = [2, 64], strides = [1, 1]} : vector<24x64xf32> to vector<2x64xf32>
    %49 = math.exp %48 : vector<2x64xf32>
    %50 = vector.extract_strided_slice %1 {offsets = [12, 0], sizes = [4, 64], strides = [1, 1]} : vector<24x64xf32> to vector<4x64xf32>
    %51 = arith.negf %50 : vector<4x64xf32>
    %52 = math.exp %51 : vector<4x64xf32>
    %cst_11 = arith.constant 1.000000e+00 : f32
    %53 = vector.broadcast %cst_11 : f32 to vector<4x64xf32>
    %54 = arith.addf %53, %52 : vector<4x64xf32>
    %55 = arith.divf %53, %54 : vector<4x64xf32>
    %56 = vector.extract_strided_slice %47 {offsets = [0, 0], sizes = [1, 64], strides = [1, 1]} : vector<2x64xf32> to vector<1x64xf32>
    %57 = arith.addf %56, %11 : vector<1x64xf32>
    %cst_12 = arith.constant 8.000000e+00 : f32
    %58 = vector.broadcast %cst_12 : f32 to vector<1x64xf32>
    %59 = arith.mulf %57, %58 : vector<1x64xf32>
    %60 = vector.extract_strided_slice %47 {offsets = [1, 0], sizes = [1, 64], strides = [1, 1]} : vector<2x64xf32> to vector<1x64xf32>
    %61 = arith.addf %60, %8 : vector<1x64xf32>
    %cst_13 = arith.constant 8.000000e+00 : f32
    %62 = vector.broadcast %cst_13 : f32 to vector<1x64xf32>
    %63 = arith.mulf %61, %62 : vector<1x64xf32>
    %64 = vector.extract_strided_slice %49 {offsets = [0, 0], sizes = [1, 64], strides = [1, 1]} : vector<2x64xf32> to vector<1x64xf32>
    %cst_14 = arith.constant 8.000000e+00 : f32
    %65 = vector.broadcast %cst_14 : f32 to vector<1x64xf32>
    %66 = arith.mulf %64, %65 : vector<1x64xf32>
    %67 = vector.extract_strided_slice %49 {offsets = [1, 0], sizes = [1, 64], strides = [1, 1]} : vector<2x64xf32> to vector<1x64xf32>
    %cst_15 = arith.constant 1.000000e+01 : f32
    %68 = vector.broadcast %cst_15 : f32 to vector<1x64xf32>
    %69 = arith.mulf %67, %68 : vector<1x64xf32>
    %70 = vector.extract_strided_slice %55 {offsets = [0, 0], sizes = [1, 64], strides = [1, 1]} : vector<4x64xf32> to vector<1x64xf32>
    %71 = vector.extract_strided_slice %55 {offsets = [1, 0], sizes = [3, 64], strides = [1, 1]} : vector<4x64xf32> to vector<3x64xf32>
    %72 = vector.extract_strided_slice %1 {offsets = [16, 0], sizes = [2, 64], strides = [1, 1]} : vector<24x64xf32> to vector<2x64xf32>
    %73 = arith.negf %72 : vector<2x64xf32>
    %74 = math.exp %73 : vector<2x64xf32>
    %cst_16 = arith.constant 1.000000e+00 : f32
    %75 = vector.broadcast %cst_16 : f32 to vector<2x64xf32>
    %76 = arith.addf %75, %74 : vector<2x64xf32>
    %77 = arith.divf %75, %76 : vector<2x64xf32>
    %78 = vector.extract_strided_slice %1 {offsets = [18, 0], sizes = [2, 64], strides = [1, 1]} : vector<24x64xf32> to vector<2x64xf32>
    %79 = math.exp %78 : vector<2x64xf32>
    %80 = vector.extract_strided_slice %1 {offsets = [20, 0], sizes = [4, 64], strides = [1, 1]} : vector<24x64xf32> to vector<4x64xf32>
    %81 = arith.negf %80 : vector<4x64xf32>
    %82 = math.exp %81 : vector<4x64xf32>
    %cst_17 = arith.constant 1.000000e+00 : f32
    %83 = vector.broadcast %cst_17 : f32 to vector<4x64xf32>
    %84 = arith.addf %83, %82 : vector<4x64xf32>
    %85 = arith.divf %83, %84 : vector<4x64xf32>
    %86 = vector.extract_strided_slice %77 {offsets = [0, 0], sizes = [1, 64], strides = [1, 1]} : vector<2x64xf32> to vector<1x64xf32>
    %87 = arith.addf %86, %11 : vector<1x64xf32>
    %cst_18 = arith.constant 8.000000e+00 : f32
    %88 = vector.broadcast %cst_18 : f32 to vector<1x64xf32>
    %89 = arith.mulf %87, %88 : vector<1x64xf32>
    %90 = vector.extract_strided_slice %77 {offsets = [1, 0], sizes = [1, 64], strides = [1, 1]} : vector<2x64xf32> to vector<1x64xf32>
    %91 = arith.addf %90, %8 : vector<1x64xf32>
    %cst_19 = arith.constant 8.000000e+00 : f32
    %92 = vector.broadcast %cst_19 : f32 to vector<1x64xf32>
    %93 = arith.mulf %91, %92 : vector<1x64xf32>
    %94 = vector.extract_strided_slice %79 {offsets = [0, 0], sizes = [1, 64], strides = [1, 1]} : vector<2x64xf32> to vector<1x64xf32>
    %cst_20 = arith.constant 1.200000e+01 : f32
    %95 = vector.broadcast %cst_20 : f32 to vector<1x64xf32>
    %96 = arith.mulf %94, %95 : vector<1x64xf32>
    %97 = vector.extract_strided_slice %79 {offsets = [1, 0], sizes = [1, 64], strides = [1, 1]} : vector<2x64xf32> to vector<1x64xf32>
    %cst_21 = arith.constant 1.600000e+01 : f32
    %98 = vector.broadcast %cst_21 : f32 to vector<1x64xf32>
    %99 = arith.mulf %97, %98 : vector<1x64xf32>
    %100 = vector.extract_strided_slice %85 {offsets = [0, 0], sizes = [1, 64], strides = [1, 1]} : vector<4x64xf32> to vector<1x64xf32>
    %101 = vector.extract_strided_slice %85 {offsets = [1, 0], sizes = [3, 64], strides = [1, 1]} : vector<4x64xf32> to vector<3x64xf32>
    %102 = arith.maximumf %40, %70 : vector<1x64xf32>
    %103 = arith.maximumf %102, %100 : vector<1x64xf32>
    %cst_22 = arith.constant 1.000000e-01 : f32
    %104 = vector.broadcast %cst_22 : f32 to vector<1x64xf32>
    %105 = arith.subf %103, %104 : vector<1x64xf32>
    %106 = arith.subf %40, %105 : vector<1x64xf32>
    %cst_23 = arith.constant 0.000000e+00 : f32
    %107 = vector.broadcast %cst_23 : f32 to vector<1x64xf32>
    %108 = arith.maximumf %106, %107 : vector<1x64xf32>
    %109 = arith.subf %70, %105 : vector<1x64xf32>
    %cst_24 = arith.constant 0.000000e+00 : f32
    %110 = vector.broadcast %cst_24 : f32 to vector<1x64xf32>
    %111 = arith.maximumf %109, %110 : vector<1x64xf32>
    %112 = arith.subf %100, %105 : vector<1x64xf32>
    %cst_25 = arith.constant 0.000000e+00 : f32
    %113 = vector.broadcast %cst_25 : f32 to vector<1x64xf32>
    %114 = arith.maximumf %112, %113 : vector<1x64xf32>
    %115 = arith.addf %108, %111 : vector<1x64xf32>
    %116 = arith.addf %115, %114 : vector<1x64xf32>
    %cst_26 = arith.constant 1.000000e+00 : f32
    %117 = vector.broadcast %cst_26 : f32 to vector<1x64xf32>
    %118 = arith.divf %117, %116 : vector<1x64xf32>
    %119 = arith.mulf %108, %118 : vector<1x64xf32>
    %120 = arith.mulf %111, %118 : vector<1x64xf32>
    %121 = arith.mulf %114, %118 : vector<1x64xf32>
    %122 = arith.mulf %119, %29 : vector<1x64xf32>
    %123 = arith.mulf %120, %59 : vector<1x64xf32>
    %124 = arith.addf %122, %123 : vector<1x64xf32>
    %125 = arith.mulf %121, %89 : vector<1x64xf32>
    %126 = arith.addf %124, %125 : vector<1x64xf32>
    %c0_27 = arith.constant 0 : index
    %c0_28 = arith.constant 0 : index
    %c0_29 = arith.constant 0 : index
    %127 = vector.load %arg4[%c0_27, %c0_28, %c0_29] : memref<1x8x64xf32, #tpu.memory_space<vmem>>, vector<1x1x64xf32>
    %128 = vector.shape_cast %127 : vector<1x1x64xf32> to vector<1x64xf32>
    %129 = vector.shape_cast %126 : vector<1x64xf32> to vector<1x1x64xf32>
    tpu.vector_store %arg4[%c0_27, %c0_28, %c0_29], %129 {strides = array<i32>} : memref<1x8x64xf32, #tpu.memory_space<vmem>>, vector<1x1x64xf32>,
    %130 = arith.mulf %119, %33 : vector<1x64xf32>
    %131 = arith.mulf %120, %63 : vector<1x64xf32>
    %132 = arith.addf %130, %131 : vector<1x64xf32>
    %133 = arith.mulf %121, %93 : vector<1x64xf32>
    %134 = arith.addf %132, %133 : vector<1x64xf32>
    %c0_30 = arith.constant 0 : index
    %c1 = arith.constant 1 : index
    %c0_31 = arith.constant 0 : index
    %135 = vector.load %arg4[%c0_30, %c1, %c0_31] : memref<1x8x64xf32, #tpu.memory_space<vmem>>, vector<1x1x64xf32>
    %136 = vector.shape_cast %135 : vector<1x1x64xf32> to vector<1x64xf32>
    %137 = vector.shape_cast %134 : vector<1x64xf32> to vector<1x1x64xf32>
    tpu.vector_store %arg4[%c0_30, %c1, %c0_31], %137 {strides = array<i32>} : memref<1x8x64xf32, #tpu.memory_space<vmem>>, vector<1x1x64xf32>,
    %138 = arith.mulf %119, %36 : vector<1x64xf32>
    %139 = arith.mulf %120, %66 : vector<1x64xf32>
    %140 = arith.addf %138, %139 : vector<1x64xf32>
    %141 = arith.mulf %121, %96 : vector<1x64xf32>
    %142 = arith.addf %140, %141 : vector<1x64xf32>
    %c0_32 = arith.constant 0 : index
    %c2 = arith.constant 2 : index
    %c0_33 = arith.constant 0 : index
    %143 = vector.load %arg4[%c0_32, %c2, %c0_33] : memref<1x8x64xf32, #tpu.memory_space<vmem>>, vector<1x1x64xf32>
    %144 = vector.shape_cast %143 : vector<1x1x64xf32> to vector<1x64xf32>
    %145 = vector.shape_cast %142 : vector<1x64xf32> to vector<1x1x64xf32>
    tpu.vector_store %arg4[%c0_32, %c2, %c0_33], %145 {strides = array<i32>} : memref<1x8x64xf32, #tpu.memory_space<vmem>>, vector<1x1x64xf32>,
    %146 = arith.mulf %119, %39 : vector<1x64xf32>
    %147 = arith.mulf %120, %69 : vector<1x64xf32>
    %148 = arith.addf %146, %147 : vector<1x64xf32>
    %149 = arith.mulf %121, %99 : vector<1x64xf32>
    %150 = arith.addf %148, %149 : vector<1x64xf32>
    %c0_34 = arith.constant 0 : index
    %c3 = arith.constant 3 : index
    %c0_35 = arith.constant 0 : index
    %151 = vector.load %arg4[%c0_34, %c3, %c0_35] : memref<1x8x64xf32, #tpu.memory_space<vmem>>, vector<1x1x64xf32>
    %152 = vector.shape_cast %151 : vector<1x1x64xf32> to vector<1x64xf32>
    %153 = vector.shape_cast %150 : vector<1x64xf32> to vector<1x1x64xf32>
    tpu.vector_store %arg4[%c0_34, %c3, %c0_35], %153 {strides = array<i32>} : memref<1x8x64xf32, #tpu.memory_space<vmem>>, vector<1x1x64xf32>,
    %cst_36 = arith.constant 1.000000e-01 : f32
    %154 = vector.broadcast %cst_36 : f32 to vector<1x64xf32>
    %155 = arith.addf %105, %154 : vector<1x64xf32>
    %c0_37 = arith.constant 0 : index
    %c4 = arith.constant 4 : index
    %c0_38 = arith.constant 0 : index
    %156 = vector.load %arg4[%c0_37, %c4, %c0_38] : memref<1x8x64xf32, #tpu.memory_space<vmem>>, vector<1x1x64xf32>
    %157 = vector.shape_cast %156 : vector<1x1x64xf32> to vector<1x64xf32>
    %158 = vector.shape_cast %155 : vector<1x64xf32> to vector<1x1x64xf32>
    tpu.vector_store %arg4[%c0_37, %c4, %c0_38], %158 {strides = array<i32>} : memref<1x8x64xf32, #tpu.memory_space<vmem>>, vector<1x1x64xf32>,
    %159 = vector.broadcast %119 : vector<1x64xf32> to vector<3x64xf32>
    %160 = arith.mulf %159, %41 : vector<3x64xf32>
    %161 = vector.broadcast %120 : vector<1x64xf32> to vector<3x64xf32>
    %162 = arith.mulf %161, %71 : vector<3x64xf32>
    %163 = arith.addf %160, %162 : vector<3x64xf32>
    %164 = vector.broadcast %121 : vector<1x64xf32> to vector<3x64xf32>
    %165 = arith.mulf %164, %101 : vector<3x64xf32>
    %166 = arith.addf %163, %165 : vector<3x64xf32>
    %c0_39 = arith.constant 0 : index
    %c5 = arith.constant 5 : index
    %c0_40 = arith.constant 0 : index
    %167 = vector.load %arg4[%c0_39, %c5, %c0_40] : memref<1x8x64xf32, #tpu.memory_space<vmem>>, vector<1x3x64xf32>
    %168 = vector.shape_cast %167 : vector<1x3x64xf32> to vector<3x64xf32>
    %169 = vector.shape_cast %166 : vector<3x64xf32> to vector<1x3x64xf32>
    tpu.vector_store %arg4[%c0_39, %c5, %c0_40], %169 {strides = array<i32>} : memref<1x8x64xf32, #tpu.memory_space<vmem>>, vector<1x3x64xf32>,
    %c0_41 = arith.constant 0 : index
    %c0_42 = arith.constant 0 : index
    %c0_43 = arith.constant 0 : index
    %170 = vector.load %arg2[%c0_41, %c0_42, %c0_43] : memref<1x24x16xf32, #tpu.memory_space<vmem>>, vector<1x24x16xf32>
    %171 = vector.shape_cast %170 : vector<1x24x16xf32> to vector<24x16xf32>
    %172 = tpu.iota {dimensions = array<i32: 1>} : vector<1x16xi32>
    %173 = arith.sitofp %172 : vector<1x16xi32> to vector<1x16xf32>
    %cst_44 = arith.constant 5.000000e-01 : f32
    %174 = vector.broadcast %cst_44 : f32 to vector<1x16xf32>
    %175 = arith.addf %173, %174 : vector<1x16xf32>
    %cst_45 = arith.constant 4.000000e+00 : f32
    %176 = vector.broadcast %cst_45 : f32 to vector<1x16xf32>
    %177 = arith.divf %175, %176 : vector<1x16xf32>
    %178 = math.floor %177 : vector<1x16xf32>
    %cst_46 = arith.constant 4.000000e+00 : f32
    %179 = vector.broadcast %cst_46 : f32 to vector<1x16xf32>
    %180 = arith.mulf %178, %179 : vector<1x16xf32>
    %181 = arith.subf %173, %180 : vector<1x16xf32>
    %182 = vector.extract_strided_slice %171 {offsets = [0, 0], sizes = [2, 16], strides = [1, 1]} : vector<24x16xf32> to vector<2x16xf32>
    %183 = arith.negf %182 : vector<2x16xf32>
    %184 = math.exp %183 : vector<2x16xf32>
    %cst_47 = arith.constant 1.000000e+00 : f32
    %185 = vector.broadcast %cst_47 : f32 to vector<2x16xf32>
    %186 = arith.addf %185, %184 : vector<2x16xf32>
    %187 = arith.divf %185, %186 : vector<2x16xf32>
    %188 = vector.extract_strided_slice %171 {offsets = [2, 0], sizes = [2, 16], strides = [1, 1]} : vector<24x16xf32> to vector<2x16xf32>
    %189 = math.exp %188 : vector<2x16xf32>
    %190 = vector.extract_strided_slice %171 {offsets = [4, 0], sizes = [4, 16], strides = [1, 1]} : vector<24x16xf32> to vector<4x16xf32>
    %191 = arith.negf %190 : vector<4x16xf32>
    %192 = math.exp %191 : vector<4x16xf32>
    %cst_48 = arith.constant 1.000000e+00 : f32
    %193 = vector.broadcast %cst_48 : f32 to vector<4x16xf32>
    %194 = arith.addf %193, %192 : vector<4x16xf32>
    %195 = arith.divf %193, %194 : vector<4x16xf32>
    %196 = vector.extract_strided_slice %187 {offsets = [0, 0], sizes = [1, 16], strides = [1, 1]} : vector<2x16xf32> to vector<1x16xf32>
    %197 = arith.addf %196, %181 : vector<1x16xf32>
    %cst_49 = arith.constant 1.600000e+01 : f32
    %198 = vector.broadcast %cst_49 : f32 to vector<1x16xf32>
    %199 = arith.mulf %197, %198 : vector<1x16xf32>
    %200 = vector.extract_strided_slice %187 {offsets = [1, 0], sizes = [1, 16], strides = [1, 1]} : vector<2x16xf32> to vector<1x16xf32>
    %201 = arith.addf %200, %178 : vector<1x16xf32>
    %cst_50 = arith.constant 1.600000e+01 : f32
    %202 = vector.broadcast %cst_50 : f32 to vector<1x16xf32>
    %203 = arith.mulf %201, %202 : vector<1x16xf32>
    %204 = vector.extract_strided_slice %189 {offsets = [0, 0], sizes = [1, 16], strides = [1, 1]} : vector<2x16xf32> to vector<1x16xf32>
    %cst_51 = arith.constant 1.600000e+01 : f32
    %205 = vector.broadcast %cst_51 : f32 to vector<1x16xf32>
    %206 = arith.mulf %204, %205 : vector<1x16xf32>
    %207 = vector.extract_strided_slice %189 {offsets = [1, 0], sizes = [1, 16], strides = [1, 1]} : vector<2x16xf32> to vector<1x16xf32>
    %cst_52 = arith.constant 2.400000e+01 : f32
    %208 = vector.broadcast %cst_52 : f32 to vector<1x16xf32>
    %209 = arith.mulf %207, %208 : vector<1x16xf32>
    %210 = vector.extract_strided_slice %195 {offsets = [0, 0], sizes = [1, 16], strides = [1, 1]} : vector<4x16xf32> to vector<1x16xf32>
    %211 = vector.extract_strided_slice %195 {offsets = [1, 0], sizes = [3, 16], strides = [1, 1]} : vector<4x16xf32> to vector<3x16xf32>
    %212 = vector.extract_strided_slice %171 {offsets = [8, 0], sizes = [2, 16], strides = [1, 1]} : vector<24x16xf32> to vector<2x16xf32>
    %213 = arith.negf %212 : vector<2x16xf32>
    %214 = math.exp %213 : vector<2x16xf32>
    %cst_53 = arith.constant 1.000000e+00 : f32
    %215 = vector.broadcast %cst_53 : f32 to vector<2x16xf32>
    %216 = arith.addf %215, %214 : vector<2x16xf32>
    %217 = arith.divf %215, %216 : vector<2x16xf32>
    %218 = vector.extract_strided_slice %171 {offsets = [10, 0], sizes = [2, 16], strides = [1, 1]} : vector<24x16xf32> to vector<2x16xf32>
    %219 = math.exp %218 : vector<2x16xf32>
    %220 = vector.extract_strided_slice %171 {offsets = [12, 0], sizes = [4, 16], strides = [1, 1]} : vector<24x16xf32> to vector<4x16xf32>
    %221 = arith.negf %220 : vector<4x16xf32>
    %222 = math.exp %221 : vector<4x16xf32>
    %cst_54 = arith.constant 1.000000e+00 : f32
    %223 = vector.broadcast %cst_54 : f32 to vector<4x16xf32>
    %224 = arith.addf %223, %222 : vector<4x16xf32>
    %225 = arith.divf %223, %224 : vector<4x16xf32>
    %226 = vector.extract_strided_slice %217 {offsets = [0, 0], sizes = [1, 16], strides = [1, 1]} : vector<2x16xf32> to vector<1x16xf32>
    %227 = arith.addf %226, %181 : vector<1x16xf32>
    %cst_55 = arith.constant 1.600000e+01 : f32
    %228 = vector.broadcast %cst_55 : f32 to vector<1x16xf32>
    %229 = arith.mulf %227, %228 : vector<1x16xf32>
    %230 = vector.extract_strided_slice %217 {offsets = [1, 0], sizes = [1, 16], strides = [1, 1]} : vector<2x16xf32> to vector<1x16xf32>
    %231 = arith.addf %230, %178 : vector<1x16xf32>
    %cst_56 = arith.constant 1.600000e+01 : f32
    %232 = vector.broadcast %cst_56 : f32 to vector<1x16xf32>
    %233 = arith.mulf %231, %232 : vector<1x16xf32>
    %234 = vector.extract_strided_slice %219 {offsets = [0, 0], sizes = [1, 16], strides = [1, 1]} : vector<2x16xf32> to vector<1x16xf32>
    %cst_57 = arith.constant 2.400000e+01 : f32
    %235 = vector.broadcast %cst_57 : f32 to vector<1x16xf32>
    %236 = arith.mulf %234, %235 : vector<1x16xf32>
    %237 = vector.extract_strided_slice %219 {offsets = [1, 0], sizes = [1, 16], strides = [1, 1]} : vector<2x16xf32> to vector<1x16xf32>
    %cst_58 = arith.constant 3.200000e+01 : f32
    %238 = vector.broadcast %cst_58 : f32 to vector<1x16xf32>
    %239 = arith.mulf %237, %238 : vector<1x16xf32>
    %240 = vector.extract_strided_slice %225 {offsets = [0, 0], sizes = [1, 16], strides = [1, 1]} : vector<4x16xf32> to vector<1x16xf32>
    %241 = vector.extract_strided_slice %225 {offsets = [1, 0], sizes = [3, 16], strides = [1, 1]} : vector<4x16xf32> to vector<3x16xf32>
    %242 = vector.extract_strided_slice %171 {offsets = [16, 0], sizes = [2, 16], strides = [1, 1]} : vector<24x16xf32> to vector<2x16xf32>
    %243 = arith.negf %242 : vector<2x16xf32>
    %244 = math.exp %243 : vector<2x16xf32>
    %cst_59 = arith.constant 1.000000e+00 : f32
    %245 = vector.broadcast %cst_59 : f32 to vector<2x16xf32>
    %246 = arith.addf %245, %244 : vector<2x16xf32>
    %247 = arith.divf %245, %246 : vector<2x16xf32>
    %248 = vector.extract_strided_slice %171 {offsets = [18, 0], sizes = [2, 16], strides = [1, 1]} : vector<24x16xf32> to vector<2x16xf32>
    %249 = math.exp %248 : vector<2x16xf32>
    %250 = vector.extract_strided_slice %171 {offsets = [20, 0], sizes = [4, 16], strides = [1, 1]} : vector<24x16xf32> to vector<4x16xf32>
    %251 = arith.negf %250 : vector<4x16xf32>
    %252 = math.exp %251 : vector<4x16xf32>
    %cst_60 = arith.constant 1.000000e+00 : f32
    %253 = vector.broadcast %cst_60 : f32 to vector<4x16xf32>
    %254 = arith.addf %253, %252 : vector<4x16xf32>
    %255 = arith.divf %253, %254 : vector<4x16xf32>
    %256 = vector.extract_strided_slice %247 {offsets = [0, 0], sizes = [1, 16], strides = [1, 1]} : vector<2x16xf32> to vector<1x16xf32>
    %257 = arith.addf %256, %181 : vector<1x16xf32>
    %cst_61 = arith.constant 1.600000e+01 : f32
    %258 = vector.broadcast %cst_61 : f32 to vector<1x16xf32>
    %259 = arith.mulf %257, %258 : vector<1x16xf32>
    %260 = vector.extract_strided_slice %247 {offsets = [1, 0], sizes = [1, 16], strides = [1, 1]} : vector<2x16xf32> to vector<1x16xf32>
    %261 = arith.addf %260, %178 : vector<1x16xf32>
    %cst_62 = arith.constant 1.600000e+01 : f32
    %262 = vector.broadcast %cst_62 : f32 to vector<1x16xf32>
    %263 = arith.mulf %261, %262 : vector<1x16xf32>
    %264 = vector.extract_strided_slice %249 {offsets = [0, 0], sizes = [1, 16], strides = [1, 1]} : vector<2x16xf32> to vector<1x16xf32>
    %cst_63 = arith.constant 3.200000e+01 : f32
    %265 = vector.broadcast %cst_63 : f32 to vector<1x16xf32>
    %266 = arith.mulf %264, %265 : vector<1x16xf32>
    %267 = vector.extract_strided_slice %249 {offsets = [1, 0], sizes = [1, 16], strides = [1, 1]} : vector<2x16xf32> to vector<1x16xf32>
    %cst_64 = arith.constant 4.000000e+01 : f32
    %268 = vector.broadcast %cst_64 : f32 to vector<1x16xf32>
    %269 = arith.mulf %267, %268 : vector<1x16xf32>
    %270 = vector.extract_strided_slice %255 {offsets = [0, 0], sizes = [1, 16], strides = [1, 1]} : vector<4x16xf32> to vector<1x16xf32>
    %271 = vector.extract_strided_slice %255 {offsets = [1, 0], sizes = [3, 16], strides = [1, 1]} : vector<4x16xf32> to vector<3x16xf32>
    %272 = arith.maximumf %210, %240 : vector<1x16xf32>
    %273 = arith.maximumf %272, %270 : vector<1x16xf32>
    %cst_65 = arith.constant 1.000000e-01 : f32
    %274 = vector.broadcast %cst_65 : f32 to vector<1x16xf32>
    %275 = arith.subf %273, %274 : vector<1x16xf32>
    %276 = arith.subf %210, %275 : vector<1x16xf32>
    %cst_66 = arith.constant 0.000000e+00 : f32
    %277 = vector.broadcast %cst_66 : f32 to vector<1x16xf32>
    %278 = arith.maximumf %276, %277 : vector<1x16xf32>
    %279 = arith.subf %240, %275 : vector<1x16xf32>
    %cst_67 = arith.constant 0.000000e+00 : f32
    %280 = vector.broadcast %cst_67 : f32 to vector<1x16xf32>
    %281 = arith.maximumf %279, %280 : vector<1x16xf32>
    %282 = arith.subf %270, %275 : vector<1x16xf32>
    %cst_68 = arith.constant 0.000000e+00 : f32
    %283 = vector.broadcast %cst_68 : f32 to vector<1x16xf32>
    %284 = arith.maximumf %282, %283 : vector<1x16xf32>
    %285 = arith.addf %278, %281 : vector<1x16xf32>
    %286 = arith.addf %285, %284 : vector<1x16xf32>
    %cst_69 = arith.constant 1.000000e+00 : f32
    %287 = vector.broadcast %cst_69 : f32 to vector<1x16xf32>
    %288 = arith.divf %287, %286 : vector<1x16xf32>
    %289 = arith.mulf %278, %288 : vector<1x16xf32>
    %290 = arith.mulf %281, %288 : vector<1x16xf32>
    %291 = arith.mulf %284, %288 : vector<1x16xf32>
    %292 = arith.mulf %289, %199 : vector<1x16xf32>
    %293 = arith.mulf %290, %229 : vector<1x16xf32>
    %294 = arith.addf %292, %293 : vector<1x16xf32>
    %295 = arith.mulf %291, %259 : vector<1x16xf32>
    %296 = arith.addf %294, %295 : vector<1x16xf32>
    %c0_70 = arith.constant 0 : index
    %c0_71 = arith.constant 0 : index
    %c0_72 = arith.constant 0 : index
    %297 = vector.load %arg5[%c0_70, %c0_71, %c0_72] : memref<1x8x16xf32, #tpu.memory_space<vmem>>, vector<1x1x16xf32>
    %298 = vector.shape_cast %297 : vector<1x1x16xf32> to vector<1x16xf32>
    %299 = vector.shape_cast %296 : vector<1x16xf32> to vector<1x1x16xf32>
    tpu.vector_store %arg5[%c0_70, %c0_71, %c0_72], %299 {strides = array<i32>} : memref<1x8x16xf32, #tpu.memory_space<vmem>>, vector<1x1x16xf32>,
    %300 = arith.mulf %289, %203 : vector<1x16xf32>
    %301 = arith.mulf %290, %233 : vector<1x16xf32>
    %302 = arith.addf %300, %301 : vector<1x16xf32>
    %303 = arith.mulf %291, %263 : vector<1x16xf32>
    %304 = arith.addf %302, %303 : vector<1x16xf32>
    %c0_73 = arith.constant 0 : index
    %c1_74 = arith.constant 1 : index
    %c0_75 = arith.constant 0 : index
    %305 = vector.load %arg5[%c0_73, %c1_74, %c0_75] : memref<1x8x16xf32, #tpu.memory_space<vmem>>, vector<1x1x16xf32>
    %306 = vector.shape_cast %305 : vector<1x1x16xf32> to vector<1x16xf32>
    %307 = vector.shape_cast %304 : vector<1x16xf32> to vector<1x1x16xf32>
    tpu.vector_store %arg5[%c0_73, %c1_74, %c0_75], %307 {strides = array<i32>} : memref<1x8x16xf32, #tpu.memory_space<vmem>>, vector<1x1x16xf32>,
    %308 = arith.mulf %289, %206 : vector<1x16xf32>
    %309 = arith.mulf %290, %236 : vector<1x16xf32>
    %310 = arith.addf %308, %309 : vector<1x16xf32>
    %311 = arith.mulf %291, %266 : vector<1x16xf32>
    %312 = arith.addf %310, %311 : vector<1x16xf32>
    %c0_76 = arith.constant 0 : index
    %c2_77 = arith.constant 2 : index
    %c0_78 = arith.constant 0 : index
    %313 = vector.load %arg5[%c0_76, %c2_77, %c0_78] : memref<1x8x16xf32, #tpu.memory_space<vmem>>, vector<1x1x16xf32>
    %314 = vector.shape_cast %313 : vector<1x1x16xf32> to vector<1x16xf32>
    %315 = vector.shape_cast %312 : vector<1x16xf32> to vector<1x1x16xf32>
    tpu.vector_store %arg5[%c0_76, %c2_77, %c0_78], %315 {strides = array<i32>} : memref<1x8x16xf32, #tpu.memory_space<vmem>>, vector<1x1x16xf32>,
    %316 = arith.mulf %289, %209 : vector<1x16xf32>
    %317 = arith.mulf %290, %239 : vector<1x16xf32>
    %318 = arith.addf %316, %317 : vector<1x16xf32>
    %319 = arith.mulf %291, %269 : vector<1x16xf32>
    %320 = arith.addf %318, %319 : vector<1x16xf32>
    %c0_79 = arith.constant 0 : index
    %c3_80 = arith.constant 3 : index
    %c0_81 = arith.constant 0 : index
    %321 = vector.load %arg5[%c0_79, %c3_80, %c0_81] : memref<1x8x16xf32, #tpu.memory_space<vmem>>, vector<1x1x16xf32>
    %322 = vector.shape_cast %321 : vector<1x1x16xf32> to vector<1x16xf32>
    %323 = vector.shape_cast %320 : vector<1x16xf32> to vector<1x1x16xf32>
    tpu.vector_store %arg5[%c0_79, %c3_80, %c0_81], %323 {strides = array<i32>} : memref<1x8x16xf32, #tpu.memory_space<vmem>>, vector<1x1x16xf32>,
    %cst_82 = arith.constant 1.000000e-01 : f32
    %324 = vector.broadcast %cst_82 : f32 to vector<1x16xf32>
    %325 = arith.addf %275, %324 : vector<1x16xf32>
    %c0_83 = arith.constant 0 : index
    %c4_84 = arith.constant 4 : index
    %c0_85 = arith.constant 0 : index
    %326 = vector.load %arg5[%c0_83, %c4_84, %c0_85] : memref<1x8x16xf32, #tpu.memory_space<vmem>>, vector<1x1x16xf32>
    %327 = vector.shape_cast %326 : vector<1x1x16xf32> to vector<1x16xf32>
    %328 = vector.shape_cast %325 : vector<1x16xf32> to vector<1x1x16xf32>
    tpu.vector_store %arg5[%c0_83, %c4_84, %c0_85], %328 {strides = array<i32>} : memref<1x8x16xf32, #tpu.memory_space<vmem>>, vector<1x1x16xf32>,
    %329 = vector.broadcast %289 : vector<1x16xf32> to vector<3x16xf32>
    %330 = arith.mulf %329, %211 : vector<3x16xf32>
    %331 = vector.broadcast %290 : vector<1x16xf32> to vector<3x16xf32>
    %332 = arith.mulf %331, %241 : vector<3x16xf32>
    %333 = arith.addf %330, %332 : vector<3x16xf32>
    %334 = vector.broadcast %291 : vector<1x16xf32> to vector<3x16xf32>
    %335 = arith.mulf %334, %271 : vector<3x16xf32>
    %336 = arith.addf %333, %335 : vector<3x16xf32>
    %c0_86 = arith.constant 0 : index
    %c5_87 = arith.constant 5 : index
    %c0_88 = arith.constant 0 : index
    %337 = vector.load %arg5[%c0_86, %c5_87, %c0_88] : memref<1x8x16xf32, #tpu.memory_space<vmem>>, vector<1x3x16xf32>
    %338 = vector.shape_cast %337 : vector<1x3x16xf32> to vector<3x16xf32>
    %339 = vector.shape_cast %336 : vector<3x16xf32> to vector<1x3x16xf32>
    tpu.vector_store %arg5[%c0_86, %c5_87, %c0_88], %339 {strides = array<i32>} : memref<1x8x16xf32, #tpu.memory_space<vmem>>, vector<1x3x16xf32>,
    %c0_89 = arith.constant 0 : index
    %c0_90 = arith.constant 0 : index
    %c0_91 = arith.constant 0 : index
    %340 = vector.load %arg3[%c0_89, %c0_90, %c0_91] : memref<1x24x4xf32, #tpu.memory_space<vmem>>, vector<1x24x4xf32>
    %341 = vector.shape_cast %340 : vector<1x24x4xf32> to vector<24x4xf32>
    %342 = tpu.iota {dimensions = array<i32: 1>} : vector<1x4xi32>
    %343 = arith.sitofp %342 : vector<1x4xi32> to vector<1x4xf32>
    %cst_92 = arith.constant 5.000000e-01 : f32
    %344 = vector.broadcast %cst_92 : f32 to vector<1x4xf32>
    %345 = arith.addf %343, %344 : vector<1x4xf32>
    %cst_93 = arith.constant 2.000000e+00 : f32
    %346 = vector.broadcast %cst_93 : f32 to vector<1x4xf32>
    %347 = arith.divf %345, %346 : vector<1x4xf32>
    %348 = math.floor %347 : vector<1x4xf32>
    %cst_94 = arith.constant 2.000000e+00 : f32
    %349 = vector.broadcast %cst_94 : f32 to vector<1x4xf32>
    %350 = arith.mulf %348, %349 : vector<1x4xf32>
    %351 = arith.subf %343, %350 : vector<1x4xf32>
    %352 = vector.extract_strided_slice %341 {offsets = [0, 0], sizes = [2, 4], strides = [1, 1]} : vector<24x4xf32> to vector<2x4xf32>
    %353 = arith.negf %352 : vector<2x4xf32>
    %354 = math.exp %353 : vector<2x4xf32>
    %cst_95 = arith.constant 1.000000e+00 : f32
    %355 = vector.broadcast %cst_95 : f32 to vector<2x4xf32>
    %356 = arith.addf %355, %354 : vector<2x4xf32>
    %357 = arith.divf %355, %356 : vector<2x4xf32>
    %358 = vector.extract_strided_slice %341 {offsets = [2, 0], sizes = [2, 4], strides = [1, 1]} : vector<24x4xf32> to vector<2x4xf32>
    %359 = math.exp %358 : vector<2x4xf32>
    %360 = vector.extract_strided_slice %341 {offsets = [4, 0], sizes = [4, 4], strides = [1, 1]} : vector<24x4xf32> to vector<4x4xf32>
    %361 = arith.negf %360 : vector<4x4xf32>
    %362 = math.exp %361 : vector<4x4xf32>
    %cst_96 = arith.constant 1.000000e+00 : f32
    %363 = vector.broadcast %cst_96 : f32 to vector<4x4xf32>
    %364 = arith.addf %363, %362 : vector<4x4xf32>
    %365 = arith.divf %363, %364 : vector<4x4xf32>
    %366 = vector.extract_strided_slice %357 {offsets = [0, 0], sizes = [1, 4], strides = [1, 1]} : vector<2x4xf32> to vector<1x4xf32>
    %367 = arith.addf %366, %351 : vector<1x4xf32>
    %cst_97 = arith.constant 3.200000e+01 : f32
    %368 = vector.broadcast %cst_97 : f32 to vector<1x4xf32>
    %369 = arith.mulf %367, %368 : vector<1x4xf32>
    %370 = vector.extract_strided_slice %357 {offsets = [1, 0], sizes = [1, 4], strides = [1, 1]} : vector<2x4xf32> to vector<1x4xf32>
    %371 = arith.addf %370, %348 : vector<1x4xf32>
    %cst_98 = arith.constant 3.200000e+01 : f32
    %372 = vector.broadcast %cst_98 : f32 to vector<1x4xf32>
    %373 = arith.mulf %371, %372 : vector<1x4xf32>
    %374 = vector.extract_strided_slice %359 {offsets = [0, 0], sizes = [1, 4], strides = [1, 1]} : vector<2x4xf32> to vector<1x4xf32>
    %cst_99 = arith.constant 4.000000e+01 : f32
    %375 = vector.broadcast %cst_99 : f32 to vector<1x4xf32>
    %376 = arith.mulf %374, %375 : vector<1x4xf32>
    %377 = vector.extract_strided_slice %359 {offsets = [1, 0], sizes = [1, 4], strides = [1, 1]} : vector<2x4xf32> to vector<1x4xf32>
    %cst_100 = arith.constant 4.800000e+01 : f32
    %378 = vector.broadcast %cst_100 : f32 to vector<1x4xf32>
    %379 = arith.mulf %377, %378 : vector<1x4xf32>
    %380 = vector.extract_strided_slice %365 {offsets = [0, 0], sizes = [1, 4], strides = [1, 1]} : vector<4x4xf32> to vector<1x4xf32>
    %381 = vector.extract_strided_slice %365 {offsets = [1, 0], sizes = [3, 4], strides = [1, 1]} : vector<4x4xf32> to vector<3x4xf32>
    %382 = vector.extract_strided_slice %341 {offsets = [8, 0], sizes = [2, 4], strides = [1, 1]} : vector<24x4xf32> to vector<2x4xf32>
    %383 = arith.negf %382 : vector<2x4xf32>
    %384 = math.exp %383 : vector<2x4xf32>
    %cst_101 = arith.constant 1.000000e+00 : f32
    %385 = vector.broadcast %cst_101 : f32 to vector<2x4xf32>
    %386 = arith.addf %385, %384 : vector<2x4xf32>
    %387 = arith.divf %385, %386 : vector<2x4xf32>
    %388 = vector.extract_strided_slice %341 {offsets = [10, 0], sizes = [2, 4], strides = [1, 1]} : vector<24x4xf32> to vector<2x4xf32>
    %389 = math.exp %388 : vector<2x4xf32>
    %390 = vector.extract_strided_slice %341 {offsets = [12, 0], sizes = [4, 4], strides = [1, 1]} : vector<24x4xf32> to vector<4x4xf32>
    %391 = arith.negf %390 : vector<4x4xf32>
    %392 = math.exp %391 : vector<4x4xf32>
    %cst_102 = arith.constant 1.000000e+00 : f32
    %393 = vector.broadcast %cst_102 : f32 to vector<4x4xf32>
    %394 = arith.addf %393, %392 : vector<4x4xf32>
    %395 = arith.divf %393, %394 : vector<4x4xf32>
    %396 = vector.extract_strided_slice %387 {offsets = [0, 0], sizes = [1, 4], strides = [1, 1]} : vector<2x4xf32> to vector<1x4xf32>
    %397 = arith.addf %396, %351 : vector<1x4xf32>
    %cst_103 = arith.constant 3.200000e+01 : f32
    %398 = vector.broadcast %cst_103 : f32 to vector<1x4xf32>
    %399 = arith.mulf %397, %398 : vector<1x4xf32>
    %400 = vector.extract_strided_slice %387 {offsets = [1, 0], sizes = [1, 4], strides = [1, 1]} : vector<2x4xf32> to vector<1x4xf32>
    %401 = arith.addf %400, %348 : vector<1x4xf32>
    %cst_104 = arith.constant 3.200000e+01 : f32
    %402 = vector.broadcast %cst_104 : f32 to vector<1x4xf32>
    %403 = arith.mulf %401, %402 : vector<1x4xf32>
    %404 = vector.extract_strided_slice %389 {offsets = [0, 0], sizes = [1, 4], strides = [1, 1]} : vector<2x4xf32> to vector<1x4xf32>
    %cst_105 = arith.constant 4.800000e+01 : f32
    %405 = vector.broadcast %cst_105 : f32 to vector<1x4xf32>
    %406 = arith.mulf %404, %405 : vector<1x4xf32>
    %407 = vector.extract_strided_slice %389 {offsets = [1, 0], sizes = [1, 4], strides = [1, 1]} : vector<2x4xf32> to vector<1x4xf32>
    %cst_106 = arith.constant 5.600000e+01 : f32
    %408 = vector.broadcast %cst_106 : f32 to vector<1x4xf32>
    %409 = arith.mulf %407, %408 : vector<1x4xf32>
    %410 = vector.extract_strided_slice %395 {offsets = [0, 0], sizes = [1, 4], strides = [1, 1]} : vector<4x4xf32> to vector<1x4xf32>
    %411 = vector.extract_strided_slice %395 {offsets = [1, 0], sizes = [3, 4], strides = [1, 1]} : vector<4x4xf32> to vector<3x4xf32>
    %412 = vector.extract_strided_slice %341 {offsets = [16, 0], sizes = [2, 4], strides = [1, 1]} : vector<24x4xf32> to vector<2x4xf32>
    %413 = arith.negf %412 : vector<2x4xf32>
    %414 = math.exp %413 : vector<2x4xf32>
    %cst_107 = arith.constant 1.000000e+00 : f32
    %415 = vector.broadcast %cst_107 : f32 to vector<2x4xf32>
    %416 = arith.addf %415, %414 : vector<2x4xf32>
    %417 = arith.divf %415, %416 : vector<2x4xf32>
    %418 = vector.extract_strided_slice %341 {offsets = [18, 0], sizes = [2, 4], strides = [1, 1]} : vector<24x4xf32> to vector<2x4xf32>
    %419 = math.exp %418 : vector<2x4xf32>
    %420 = vector.extract_strided_slice %341 {offsets = [20, 0], sizes = [4, 4], strides = [1, 1]} : vector<24x4xf32> to vector<4x4xf32>
    %421 = arith.negf %420 : vector<4x4xf32>
    %422 = math.exp %421 : vector<4x4xf32>
    %cst_108 = arith.constant 1.000000e+00 : f32
    %423 = vector.broadcast %cst_108 : f32 to vector<4x4xf32>
    %424 = arith.addf %423, %422 : vector<4x4xf32>
    %425 = arith.divf %423, %424 : vector<4x4xf32>
    %426 = vector.extract_strided_slice %417 {offsets = [0, 0], sizes = [1, 4], strides = [1, 1]} : vector<2x4xf32> to vector<1x4xf32>
    %427 = arith.addf %426, %351 : vector<1x4xf32>
    %cst_109 = arith.constant 3.200000e+01 : f32
    %428 = vector.broadcast %cst_109 : f32 to vector<1x4xf32>
    %429 = arith.mulf %427, %428 : vector<1x4xf32>
    %430 = vector.extract_strided_slice %417 {offsets = [1, 0], sizes = [1, 4], strides = [1, 1]} : vector<2x4xf32> to vector<1x4xf32>
    %431 = arith.addf %430, %348 : vector<1x4xf32>
    %cst_110 = arith.constant 3.200000e+01 : f32
    %432 = vector.broadcast %cst_110 : f32 to vector<1x4xf32>
    %433 = arith.mulf %431, %432 : vector<1x4xf32>
    %434 = vector.extract_strided_slice %419 {offsets = [0, 0], sizes = [1, 4], strides = [1, 1]} : vector<2x4xf32> to vector<1x4xf32>
    %cst_111 = arith.constant 5.600000e+01 : f32
    %435 = vector.broadcast %cst_111 : f32 to vector<1x4xf32>
    %436 = arith.mulf %434, %435 : vector<1x4xf32>
    %437 = vector.extract_strided_slice %419 {offsets = [1, 0], sizes = [1, 4], strides = [1, 1]} : vector<2x4xf32> to vector<1x4xf32>
    %cst_112 = arith.constant 6.000000e+01 : f32
    %438 = vector.broadcast %cst_112 : f32 to vector<1x4xf32>
    %439 = arith.mulf %437, %438 : vector<1x4xf32>
    %440 = vector.extract_strided_slice %425 {offsets = [0, 0], sizes = [1, 4], strides = [1, 1]} : vector<4x4xf32> to vector<1x4xf32>
    %441 = vector.extract_strided_slice %425 {offsets = [1, 0], sizes = [3, 4], strides = [1, 1]} : vector<4x4xf32> to vector<3x4xf32>
    %442 = arith.maximumf %380, %410 : vector<1x4xf32>
    %443 = arith.maximumf %442, %440 : vector<1x4xf32>
    %cst_113 = arith.constant 1.000000e-01 : f32
    %444 = vector.broadcast %cst_113 : f32 to vector<1x4xf32>
    %445 = arith.subf %443, %444 : vector<1x4xf32>
    %446 = arith.subf %380, %445 : vector<1x4xf32>
    %cst_114 = arith.constant 0.000000e+00 : f32
    %447 = vector.broadcast %cst_114 : f32 to vector<1x4xf32>
    %448 = arith.maximumf %446, %447 : vector<1x4xf32>
    %449 = arith.subf %410, %445 : vector<1x4xf32>
    %cst_115 = arith.constant 0.000000e+00 : f32
    %450 = vector.broadcast %cst_115 : f32 to vector<1x4xf32>
    %451 = arith.maximumf %449, %450 : vector<1x4xf32>
    %452 = arith.subf %440, %445 : vector<1x4xf32>
    %cst_116 = arith.constant 0.000000e+00 : f32
    %453 = vector.broadcast %cst_116 : f32 to vector<1x4xf32>
    %454 = arith.maximumf %452, %453 : vector<1x4xf32>
    %455 = arith.addf %448, %451 : vector<1x4xf32>
    %456 = arith.addf %455, %454 : vector<1x4xf32>
    %cst_117 = arith.constant 1.000000e+00 : f32
    %457 = vector.broadcast %cst_117 : f32 to vector<1x4xf32>
    %458 = arith.divf %457, %456 : vector<1x4xf32>
    %459 = arith.mulf %448, %458 : vector<1x4xf32>
    %460 = arith.mulf %451, %458 : vector<1x4xf32>
    %461 = arith.mulf %454, %458 : vector<1x4xf32>
    %462 = arith.mulf %459, %369 : vector<1x4xf32>
    %463 = arith.mulf %460, %399 : vector<1x4xf32>
    %464 = arith.addf %462, %463 : vector<1x4xf32>
    %465 = arith.mulf %461, %429 : vector<1x4xf32>
    %466 = arith.addf %464, %465 : vector<1x4xf32>
    %c0_118 = arith.constant 0 : index
    %c0_119 = arith.constant 0 : index
    %c0_120 = arith.constant 0 : index
    %467 = vector.load %arg6[%c0_118, %c0_119, %c0_120] : memref<1x8x4xf32, #tpu.memory_space<vmem>>, vector<1x1x4xf32>
    %468 = vector.shape_cast %467 : vector<1x1x4xf32> to vector<1x4xf32>
    %469 = vector.shape_cast %466 : vector<1x4xf32> to vector<1x1x4xf32>
    tpu.vector_store %arg6[%c0_118, %c0_119, %c0_120], %469 {strides = array<i32>} : memref<1x8x4xf32, #tpu.memory_space<vmem>>, vector<1x1x4xf32>,
    %470 = arith.mulf %459, %373 : vector<1x4xf32>
    %471 = arith.mulf %460, %403 : vector<1x4xf32>
    %472 = arith.addf %470, %471 : vector<1x4xf32>
    %473 = arith.mulf %461, %433 : vector<1x4xf32>
    %474 = arith.addf %472, %473 : vector<1x4xf32>
    %c0_121 = arith.constant 0 : index
    %c1_122 = arith.constant 1 : index
    %c0_123 = arith.constant 0 : index
    %475 = vector.load %arg6[%c0_121, %c1_122, %c0_123] : memref<1x8x4xf32, #tpu.memory_space<vmem>>, vector<1x1x4xf32>
    %476 = vector.shape_cast %475 : vector<1x1x4xf32> to vector<1x4xf32>
    %477 = vector.shape_cast %474 : vector<1x4xf32> to vector<1x1x4xf32>
    tpu.vector_store %arg6[%c0_121, %c1_122, %c0_123], %477 {strides = array<i32>} : memref<1x8x4xf32, #tpu.memory_space<vmem>>, vector<1x1x4xf32>,
    %478 = arith.mulf %459, %376 : vector<1x4xf32>
    %479 = arith.mulf %460, %406 : vector<1x4xf32>
    %480 = arith.addf %478, %479 : vector<1x4xf32>
    %481 = arith.mulf %461, %436 : vector<1x4xf32>
    %482 = arith.addf %480, %481 : vector<1x4xf32>
    %c0_124 = arith.constant 0 : index
    %c2_125 = arith.constant 2 : index
    %c0_126 = arith.constant 0 : index
    %483 = vector.load %arg6[%c0_124, %c2_125, %c0_126] : memref<1x8x4xf32, #tpu.memory_space<vmem>>, vector<1x1x4xf32>
    %484 = vector.shape_cast %483 : vector<1x1x4xf32> to vector<1x4xf32>
    %485 = vector.shape_cast %482 : vector<1x4xf32> to vector<1x1x4xf32>
    tpu.vector_store %arg6[%c0_124, %c2_125, %c0_126], %485 {strides = array<i32>} : memref<1x8x4xf32, #tpu.memory_space<vmem>>, vector<1x1x4xf32>,
    %486 = arith.mulf %459, %379 : vector<1x4xf32>
    %487 = arith.mulf %460, %409 : vector<1x4xf32>
    %488 = arith.addf %486, %487 : vector<1x4xf32>
    %489 = arith.mulf %461, %439 : vector<1x4xf32>
    %490 = arith.addf %488, %489 : vector<1x4xf32>
    %c0_127 = arith.constant 0 : index
    %c3_128 = arith.constant 3 : index
    %c0_129 = arith.constant 0 : index
    %491 = vector.load %arg6[%c0_127, %c3_128, %c0_129] : memref<1x8x4xf32, #tpu.memory_space<vmem>>, vector<1x1x4xf32>
    %492 = vector.shape_cast %491 : vector<1x1x4xf32> to vector<1x4xf32>
    %493 = vector.shape_cast %490 : vector<1x4xf32> to vector<1x1x4xf32>
    tpu.vector_store %arg6[%c0_127, %c3_128, %c0_129], %493 {strides = array<i32>} : memref<1x8x4xf32, #tpu.memory_space<vmem>>, vector<1x1x4xf32>,
    %cst_130 = arith.constant 1.000000e-01 : f32
    %494 = vector.broadcast %cst_130 : f32 to vector<1x4xf32>
    %495 = arith.addf %445, %494 : vector<1x4xf32>
    %c0_131 = arith.constant 0 : index
    %c4_132 = arith.constant 4 : index
    %c0_133 = arith.constant 0 : index
    %496 = vector.load %arg6[%c0_131, %c4_132, %c0_133] : memref<1x8x4xf32, #tpu.memory_space<vmem>>, vector<1x1x4xf32>
    %497 = vector.shape_cast %496 : vector<1x1x4xf32> to vector<1x4xf32>
    %498 = vector.shape_cast %495 : vector<1x4xf32> to vector<1x1x4xf32>
    tpu.vector_store %arg6[%c0_131, %c4_132, %c0_133], %498 {strides = array<i32>} : memref<1x8x4xf32, #tpu.memory_space<vmem>>, vector<1x1x4xf32>,
    %499 = vector.broadcast %459 : vector<1x4xf32> to vector<3x4xf32>
    %500 = arith.mulf %499, %381 : vector<3x4xf32>
    %501 = vector.broadcast %460 : vector<1x4xf32> to vector<3x4xf32>
    %502 = arith.mulf %501, %411 : vector<3x4xf32>
    %503 = arith.addf %500, %502 : vector<3x4xf32>
    %504 = vector.broadcast %461 : vector<1x4xf32> to vector<3x4xf32>
    %505 = arith.mulf %504, %441 : vector<3x4xf32>
    %506 = arith.addf %503, %505 : vector<3x4xf32>
    %c0_134 = arith.constant 0 : index
    %c5_135 = arith.constant 5 : index
    %c0_136 = arith.constant 0 : index
    %507 = vector.load %arg6[%c0_134, %c5_135, %c0_136] : memref<1x8x4xf32, #tpu.memory_space<vmem>>, vector<1x3x4xf32>
    %508 = vector.shape_cast %507 : vector<1x3x4xf32> to vector<3x4xf32>
    %509 = vector.shape_cast %506 : vector<3x4xf32> to vector<1x3x4xf32>
    tpu.vector_store %arg6[%c0_134, %c5_135, %c0_136], %509 {strides = array<i32>} : memref<1x8x4xf32, #tpu.memory_space<vmem>>, vector<1x3x4xf32>,
    return
  }
  func.func @transform_0(%arg0: i32) -> (i32, i32, i32) {
    %c0_i32 = arith.constant 0 : i32
    %c0_i32_0 = arith.constant 0 : i32
    %c0_i32_1 = arith.constant 0 : i32
    return %arg0, %c0_i32, %c0_i32_0 : i32, i32, i32
  }
  func.func @transform_1(%arg0: i32) -> (i32, i32, i32) {
    %c0_i32 = arith.constant 0 : i32
    %c0_i32_0 = arith.constant 0 : i32
    %c0_i32_1 = arith.constant 0 : i32
    return %arg0, %c0_i32, %c0_i32_0 : i32, i32, i32
  }
  func.func @transform_2(%arg0: i32) -> (i32, i32, i32) {
    %c0_i32 = arith.constant 0 : i32
    %c0_i32_0 = arith.constant 0 : i32
    %c0_i32_1 = arith.constant 0 : i32
    return %arg0, %c0_i32, %c0_i32_0 : i32, i32, i32
  }
  func.func @transform_3(%arg0: i32) -> (i32, i32, i32) {
    %c0_i32 = arith.constant 0 : i32
    %c0_i32_0 = arith.constant 0 : i32
    %c0_i32_1 = arith.constant 0 : i32
    return %arg0, %c0_i32, %c0_i32_0 : i32, i32, i32
  }
  func.func @transform_4(%arg0: i32) -> (i32, i32, i32) {
    %c0_i32 = arith.constant 0 : i32
    %c0_i32_0 = arith.constant 0 : i32
    %c0_i32_1 = arith.constant 0 : i32
    return %arg0, %c0_i32, %c0_i32_0 : i32, i32, i32
  }
  func.func @transform_5(%arg0: i32) -> (i32, i32, i32) {
    %c0_i32 = arith.constant 0 : i32
    %c0_i32_0 = arith.constant 0 : i32
    %c0_i32_1 = arith.constant 0 : i32
    return %arg0, %c0_i32, %c0_i32_0 : i32, i32, i32
  }
}

</mosaic_0001>

<llo_original>
// kernel: tpu_custom_call.1
$region0: #{tpu_custom_call.1}
  #allocation0 [shape = 'u32[]', space=smem, size = 0x4, offset = 0x4, fixed_abs, tag = 'smem constant byte address 0x4 - core index']
  #allocation1 [shape = 'u32[144,128]{1,0:T(1,128)}', space=vmem, size = 0x12000, scoped, tag = 'internal scratch']
  %s0 = inlined_call_operand.vmem [shape: f32[2,24,64], index: 0, kind: input, shape index: {}]
  %s1 = inlined_call_operand.vmem [shape: f32[2,24,16], index: 1, kind: input, shape index: {}]
  %s2 = inlined_call_operand.vmem [shape: f32[2,24,4], index: 2, kind: input, shape index: {}]
  %s3 = inlined_call_operand.hbm [shape: f32[2,8,64], index: 3, kind: output, shape index: {0}]
  %s4 = inlined_call_operand.hbm [shape: f32[2,8,16], index: 4, kind: output, shape index: {1}]
  %s5 = inlined_call_operand.vmem [shape: f32[2,8,4], index: 5, kind: output, shape index: {2}]
  %6 = xla_tuple %s3, %s4, %s5
  %s7 = sld [smem:[#allocation0]]
  $region61: #{tpu_custom_call.1} parent=0
    _
  %s9 = ssub.s32 1, %s7
  %s10 = scalar_select 0, %s9, %s7
  $region1: #{tpu_custom_call.1} parent=0
    #allocation2 [shape = 'u8[8192]{0}', space=vmem, size = 0x2000, scoped, tag = 'output window, operand 0']
    #allocation3 [shape = 's32[2]{0}', space=sflag, size = 0x8, scoped, tag = 'scoped memory for tpu_custom_call.1']
    #allocation4 [shape = 'u8[8192]{0}', space=vmem, size = 0x2000, scoped, tag = 'output window, operand 1']
    #allocation5 [shape = 's32[2]{0}', space=sflag, size = 0x8, scoped, tag = 'scoped memory for tpu_custom_call.1']
    %11 = vsyncpa [#allocation3], 0
    %s12 = scalar_lea.sflag [#allocation3], 1
    %13 = vsyncpa %s12, 0
    %14 = vsyncpa [#allocation5], 0
    %s15 = scalar_lea.sflag [#allocation5], 1
    %16 = vsyncpa %s15, 0
    loop: start=0, step=1, limit=4
    $region2: #{tpu_custom_call.1} parent=1 // loop_pre_header
      _
    $region3: #{tpu_custom_call.1} parent=1 // loop_header
      %s18 = sphi 0, %s22
      %p19 = scmp.ge.s32.totalorder %s18, 4
      %s28 = sphi 0, %s30
      %s31 = sphi 0, %s28
      %s32 = sphi 0, %s31
      %s48 = sphi 0, %s32
      %s54 = sphi 0, %s56
      %s57 = sphi 0, %s54
      %s58 = sphi 0, %s57
      %s74 = sphi 0, %s58
      %s80 = sphi 0, %s82
      %s83 = sphi 0, %s80
      %s84 = sphi 0, %s83
      %s100 = sphi 0, %s84
      %s106 = sphi 0, %s108
      %s109 = sphi 0, %s106
      %s110 = sphi 0, %s109
      %s126 = sphi 0, %s110
      %s132 = sphi 0, %s134
      %s135 = sphi 0, %s132
      %s136 = sphi 0, %s135
      %s152 = sphi 0, %s136
      %s158 = sphi 0, %s160
      %s161 = sphi 0, %s158
      %s162 = sphi 0, %s161
      %s178 = sphi 0, %s162
    $region4: #{tpu_custom_call.1} parent=1 // loop_header_branch
      %21 = sbr.rel (%p19) target = $region8
    $region5: #{tpu_custom_call.1} parent=1 // loop_body
      %s23 = ssub.s32 %s18, 1
      %s24 = ssub.s32 %s18, 2
      %s25 = sadd.s32 %s18, 1
      %s26 = ssub.s32 %s18, %s25
      %p27 = scmp.eq.s32.totalorder %s26, 0
      %s29 = sadd.s32 %s28, 1
      %s30 = scalar_select %p27, %s28, %s29
      %p33 = pneg %p27
      %p34 = scmp.eq.s32.totalorder %s18, 1
      %p35 = por %p33, %p34
      %p36 = scmp.ne.s32.totalorder %s28, %s31
      %p37 = scmp.eq.s32.totalorder %s18, 0
      %p38 = por %p36, %p37
      %p39 = scmp.ne.s32.totalorder %s28, %s31
      %p40 = scmp.eq.s32.totalorder %s23, 1
      %p41 = por %p39, %p40
      %p42 = scmp.ne.s32.totalorder %s31, %s32
      %p43 = scmp.eq.s32.totalorder %s23, 0
      %p44 = por %p42, %p43
      %p45 = scmp.ne.s32.totalorder %s31, %s32
      %p46 = scmp.eq.s32.totalorder %s24, 1
      %p47 = por %p45, %p46
      %p49 = scmp.ne.s32.totalorder %s32, %s48
      %p50 = scmp.eq.s32.totalorder %s24, 0
      %p51 = por %p49, %p50
      %s52 = ssub.s32 %s18, %s25
      %p53 = scmp.eq.s32.totalorder %s52, 0
      %s55 = sadd.s32 %s54, 1
      %s56 = scalar_select %p53, %s54, %s55
      %p59 = pneg %p53
      %p60 = scmp.eq.s32.totalorder %s18, 1
      %p61 = por %p59, %p60
      %p62 = scmp.ne.s32.totalorder %s54, %s57
      %p63 = scmp.eq.s32.totalorder %s18, 0
      %p64 = por %p62, %p63
      %p65 = scmp.ne.s32.totalorder %s54, %s57
      %p66 = scmp.eq.s32.totalorder %s23, 1
      %p67 = por %p65, %p66
      %p68 = scmp.ne.s32.totalorder %s57, %s58
      %p69 = scmp.eq.s32.totalorder %s23, 0
      %p70 = por %p68, %p69
      %p71 = scmp.ne.s32.totalorder %s57, %s58
      %p72 = scmp.eq.s32.totalorder %s24, 1
      %p73 = por %p71, %p72
      %p75 = scmp.ne.s32.totalorder %s58, %s74
      %p76 = scmp.eq.s32.totalorder %s24, 0
      %p77 = por %p75, %p76
      %s78 = ssub.s32 %s18, %s25
      %p79 = scmp.eq.s32.totalorder %s78, 0
      %s81 = sadd.s32 %s80, 1
      %s82 = scalar_select %p79, %s80, %s81
      %p85 = pneg %p79
      %p86 = scmp.eq.s32.totalorder %s18, 1
      %p87 = por %p85, %p86
      %p88 = scmp.ne.s32.totalorder %s80, %s83
      %p89 = scmp.eq.s32.totalorder %s18, 0
      %p90 = por %p88, %p89
      %p91 = scmp.ne.s32.totalorder %s80, %s83
      %p92 = scmp.eq.s32.totalorder %s23, 1
      %p93 = por %p91, %p92
      %p94 = scmp.ne.s32.totalorder %s83, %s84
      %p95 = scmp.eq.s32.totalorder %s23, 0
      %p96 = por %p94, %p95
      %p97 = scmp.ne.s32.totalorder %s83, %s84
      %p98 = scmp.eq.s32.totalorder %s24, 1
      %p99 = por %p97, %p98
      %p101 = scmp.ne.s32.totalorder %s84, %s100
      %p102 = scmp.eq.s32.totalorder %s24, 0
      %p103 = por %p101, %p102
      %s104 = ssub.s32 %s18, %s25
      %p105 = scmp.eq.s32.totalorder %s104, 0
      %s107 = sadd.s32 %s106, 1
      %s108 = scalar_select %p105, %s106, %s107
      %p111 = pneg %p105
      %p112 = scmp.eq.s32.totalorder %s18, 1
      %p113 = por %p111, %p112
      %p114 = scmp.ne.s32.totalorder %s106, %s109
      %p115 = scmp.eq.s32.totalorder %s18, 0
      %p116 = por %p114, %p115
      %p117 = scmp.ne.s32.totalorder %s106, %s109
      %p118 = scmp.eq.s32.totalorder %s23, 1
      %p119 = por %p117, %p118
      %p120 = scmp.ne.s32.totalorder %s109, %s110
      %p121 = scmp.eq.s32.totalorder %s23, 0
      %p122 = por %p120, %p121
      %p123 = scmp.ne.s32.totalorder %s109, %s110
      %p124 = scmp.eq.s32.totalorder %s24, 1
      %p125 = por %p123, %p124
      %p127 = scmp.ne.s32.totalorder %s110, %s126
      %p128 = scmp.eq.s32.totalorder %s24, 0
      %p129 = por %p127, %p128
      %s130 = ssub.s32 %s18, %s25
      %p131 = scmp.eq.s32.totalorder %s130, 0
      %s133 = sadd.s32 %s132, 1
      %s134 = scalar_select %p131, %s132, %s133
      %p137 = pneg %p131
      %p138 = scmp.eq.s32.totalorder %s18, 1
      %p139 = por %p137, %p138
      %p140 = scmp.ne.s32.totalorder %s132, %s135
      %p141 = scmp.eq.s32.totalorder %s18, 0
      %p142 = por %p140, %p141
      %p143 = scmp.ne.s32.totalorder %s132, %s135
      %p144 = scmp.eq.s32.totalorder %s23, 1
      %p145 = por %p143, %p144
      %p146 = scmp.ne.s32.totalorder %s135, %s136
      %p147 = scmp.eq.s32.totalorder %s23, 0
      %p148 = por %p146, %p147
      %p149 = scmp.ne.s32.totalorder %s135, %s136
      %p150 = scmp.eq.s32.totalorder %s24, 1
      %p151 = por %p149, %p150
      %p153 = scmp.ne.s32.totalorder %s136, %s152
      %p154 = scmp.eq.s32.totalorder %s24, 0
      %p155 = por %p153, %p154
      %s156 = ssub.s32 %s18, %s25
      %p157 = scmp.eq.s32.totalorder %s156, 0
      %s159 = sadd.s32 %s158, 1
      %s160 = scalar_select %p157, %s158, %s159
      %p163 = pneg %p157
      %p164 = scmp.eq.s32.totalorder %s18, 1
      %p165 = por %p163, %p164
      %p166 = scmp.ne.s32.totalorder %s158, %s161
      %p167 = scmp.eq.s32.totalorder %s18, 0
      %p168 = por %p166, %p167
      %p169 = scmp.ne.s32.totalorder %s158, %s161
      %p170 = scmp.eq.s32.totalorder %s23, 1
      %p171 = por %p169, %p170
      %p172 = scmp.ne.s32.totalorder %s161, %s162
      %p173 = scmp.eq.s32.totalorder %s23, 0
      %p174 = por %p172, %p173
      %p175 = scmp.ne.s32.totalorder %s161, %s162
      %p176 = scmp.eq.s32.totalorder %s24, 1
      %p177 = por %p175, %p176
      %p179 = scmp.ne.s32.totalorder %s162, %s178
      %p180 = scmp.eq.s32.totalorder %s24, 0
      %p181 = por %p179, %p180
      %p182 = scmp.le.s32.totalorder 1, %s18
      %p183 = scmp.lt.s32.totalorder %s18, 3
      %p184 = pnand %p182, %p183
      %p185 = pneg %p184
      // Predicated region
      $region9: #{tpu_custom_call.1} parent=5 // pred_check
        _
      $region10: #{tpu_custom_call.1} parent=5 // pred_check_branch
        %187 = sbr.rel (%p184) target = $region12
      $region11: #{tpu_custom_call.1} parent=5 // pred_region
        %s188 = ssub.s32 %s18, 1
      $region12: #{tpu_custom_call.1} parent=5 // pred_fallthru
        _
      %p189 = scmp.lt.s32.totalorder %s18, 2
      // Predicated region
      $region13: #{tpu_custom_call.1} parent=5 // pred_check
        %p190 = pneg %p189
      $region14: #{tpu_custom_call.1} parent=5 // pred_check_branch
        %192 = sbr.rel (%p190) target = $region16
      $region15: #{tpu_custom_call.1} parent=5 // pred_region
        // Predicated region
        $region17: #{tpu_custom_call.1} parent=15 // pred_check
          %p193 = pneg %p38
        $region18: #{tpu_custom_call.1} parent=15 // pred_check_branch
          %195 = sbr.rel (%p193) target = $region20
        $region19: #{tpu_custom_call.1} parent=15 // pred_region
          %p196 = scmp.lt.s32.totalorder %s18, 1
          %s197 = scalar_select %p196, %s18, 1
          %s198 = smul.addr %s197, 3
          %s199 = smul.addr %s198, 8
          %s200 = scalar_lea.vmem %s0, %s199
        $region20: #{tpu_custom_call.1} parent=15 // pred_fallthru
          _
        // Predicated region
        $region21: #{tpu_custom_call.1} parent=15 // pred_check
          %p201 = pneg %p64
        $region22: #{tpu_custom_call.1} parent=15 // pred_check_branch
          %203 = sbr.rel (%p201) target = $region24
        $region23: #{tpu_custom_call.1} parent=15 // pred_region
          %p204 = scmp.lt.s32.totalorder %s18, 1
          %s205 = scalar_select %p204, %s18, 1
          %s206 = smul.addr %s205, 3
          %s207 = smul.addr %s206, 8
          %s208 = scalar_lea.vmem %s1, %s207
        $region24: #{tpu_custom_call.1} parent=15 // pred_fallthru
          _
        // Predicated region
        $region25: #{tpu_custom_call.1} parent=15 // pred_check
          %p209 = pneg %p90
        $region26: #{tpu_custom_call.1} parent=15 // pred_check_branch
          %211 = sbr.rel (%p209) target = $region28
        $region27: #{tpu_custom_call.1} parent=15 // pred_region
          %p212 = scmp.lt.s32.totalorder %s18, 1
          %s213 = scalar_select %p212, %s18, 1
          %s214 = smul.addr %s213, 3
          %s215 = smul.addr %s214, 8
          %s216 = scalar_lea.vmem %s2, %s215
        $region28: #{tpu_custom_call.1} parent=15 // pred_fallthru
          _
      $region16: #{tpu_custom_call.1} parent=5 // pred_fallthru
        _
      %p217 = scmp.le.s32.totalorder 1, %s18
      %p218 = scmp.lt.s32.totalorder %s18, 3
      %p219 = pnand %p217, %p218
      %p220 = pneg %p219
      // Predicated region
      $region29: #{tpu_custom_call.1} parent=5 // pred_check
        _
      $region30: #{tpu_custom_call.1} parent=5 // pred_check_branch
        %222 = sbr.rel (%p219) target = $region32
      $region31: #{tpu_custom_call.1} parent=5 // pred_region
        %s223 = ssub.s32 %s18, 1
        %p224 = scmp.lt.s32.totalorder %s23, 1
        %s225 = scalar_select %p224, %s23, 1
        %s226 = smul.addr %s225, 3
        %s227 = smul.addr %s226, 8
        %s228 = scalar_lea.vmem %s0, %s227
        %p229 = pneg %p44
        %p230 = pneg %p41
        %p231 = scmp.lt.s32.totalorder %s23, 1
        %s232 = scalar_select %p231, %s23, 1
        %s233 = smul.addr %s232, 3
        %s234 = smul.addr %s233, 8
        %s235 = scalar_lea.vmem %s1, %s234
        %p236 = pneg %p70
        %p237 = pneg %p67
        %p238 = scmp.lt.s32.totalorder %s23, 1
        %s239 = scalar_select %p238, %s23, 1
        %s240 = smul.addr %s239, 3
        %s241 = smul.addr %s240, 8
        %s242 = scalar_lea.vmem %s2, %s241
        %p243 = pneg %p96
        %p244 = pneg %p93
        %p245 = pneg %p122
        %p246 = pneg %p119
        %s247 = sand.u32 %s109, 1
        %s248 = scalar_lea.sflag [#allocation3], %s247
        %s249 = sand.u32 %s109, 1
        %s250 = smul.addr %s249, 8
        %s251 = scalar_lea.vmem [#allocation2], %s250
        %p252 = pneg %p148
        %p253 = pneg %p145
        %s254 = sand.u32 %s135, 1
        %s255 = scalar_lea.sflag [#allocation5], %s254
        %s256 = sand.u32 %s135, 1
        %s257 = smul.addr %s256, 8
        %s258 = scalar_lea.vmem [#allocation4], %s257
        %p259 = pneg %p174
        %p260 = pneg %p171
        %p261 = scmp.lt.s32.totalorder %s23, 1
        %s262 = scalar_select %p261, %s23, 1
        %s263 = smul.addr %s262, 8
        %s264 = scalar_lea.vmem %s5, %s263
        %p265 = scmp.lt.s32.totalorder %s23, 1
        %s266 = scalar_select %p265, %s23, 1
        %s267 = smul.addr %s266, 3
        %s268 = smul.addr %s267, 8
        %s269 = scalar_lea.vmem %s0, %s268
        %p270 = scmp.lt.s32.totalorder %s23, 1
        %s271 = scalar_select %p270, %s23, 1
        %s272 = smul.addr %s271, 3
        %s273 = smul.addr %s272, 8
        %s274 = scalar_lea.vmem %s1, %s273
        %p275 = scmp.lt.s32.totalorder %s23, 1
        %s276 = scalar_select %p275, %s23, 1
        %s277 = smul.addr %s276, 3
        %s278 = smul.addr %s277, 8
        %s279 = scalar_lea.vmem %s2, %s278
        %p280 = scmp.lt.s32.totalorder %s23, 1
        %s281 = scalar_select %p280, %s23, 1
        %s282 = smul.addr %s281, 8
        %s283 = scalar_lea.vmem %s5, %s282
        %v284 = vld [vmem:[%s269] sm:$0xff]
        %v285 = vld [vmem:[%s269 + $0x8] sm:$0xff]
        %v286 = vld [vmem:[%s269 + $0x10] sm:$0xff]
        %v287 = vlaneseq
        %v288 = vand.u32 %v287, 127
        %v289 = vcvt.s32.f32 %v288
        %v290 = vadd.f32 %v289, 0.5
        %v291 = vrcp.pop 8.0
        %v292 = vmul.f32 %v290, %v291
        %v293 = vfloor.f32 %v292
        %v294 = vmul.f32 %v293, 8.0
        %v295 = vsub.f32 %v289, %v294
        %v296 = vxor.u32 %v284, 2147483648
        %v297 = vmul.f32 %v296, 1.442695
        %v298 = vpow.pop %v297
        %v299 = vadd.f32 %v298, 1.0
        %v300 = vrcp.pop %v299
        %v301 = vmul.f32 1.0, %v300
        %v302 = vmul.f32 %v284, 1.442695
        %v303 = vpow.pop %v302
        %v304 = vadd.f32 %v301, %v295
        %v305 = vmul.f32 %v304, 8.0
        %v306 = vadd.f32 %v301, %v293
        %v307 = vmul.f32 %v306, 8.0
        %v308 = vmul.f32 %v303, 4.0
        %v309 = vmul.f32 %v303, 6.0
        %v310 = vxor.u32 %v285, 2147483648
        %v311 = vmul.f32 %v310, 1.442695
        %v312 = vpow.pop %v311
        %v313 = vadd.f32 %v312, 1.0
        %v314 = vrcp.pop %v313
        %v315 = vmul.f32 1.0, %v314
        %v316 = vmul.f32 %v285, 1.442695
        %v317 = vpow.pop %v316
        %v318 = vadd.f32 %v315, %v295
        %v319 = vmul.f32 %v318, 8.0
        %v320 = vadd.f32 %v315, %v293
        %v321 = vmul.f32 %v320, 8.0
        %v322 = vmul.f32 %v317, 8.0
        %v323 = vmul.f32 %v317, 10.0
        %v324 = vxor.u32 %v286, 2147483648
        %v325 = vmul.f32 %v324, 1.442695
        %v326 = vpow.pop %v325
        %v327 = vadd.f32 %v326, 1.0
        %v328 = vrcp.pop %v327
        %v329 = vmul.f32 1.0, %v328
        %v330 = vmul.f32 %v286, 1.442695
        %v331 = vpow.pop %v330
        %v332 = vadd.f32 %v329, %v295
        %v333 = vmul.f32 %v332, 8.0
        %v334 = vadd.f32 %v329, %v293
        %v335 = vmul.f32 %v334, 8.0
        %v336 = vmul.f32 %v331, 12.0
        %v337 = vmul.f32 %v331, 16.0
        %v338 = vmax.f32 %v301, %v315
        %v339 = vmax.f32 %v338, %v329
        %v340 = vsub.f32 %v339, 0.1
        %v341 = vsub.f32 %v301, %v340
        %v342 = vmax.f32 %v341, 0.0
        %v343 = vsub.f32 %v315, %v340
        %v344 = vmax.f32 %v343, 0.0
        %v345 = vsub.f32 %v329, %v340
        %v346 = vmax.f32 %v345, 0.0
        %v347 = vadd.f32 %v342, %v344
        %v348 = vadd.f32 %v347, %v346
        %v349 = vrcp.pop %v348
        %v350 = vmul.f32 1.0, %v349
        %v351 = vmul.f32 %v342, %v350
        %v352 = vmul.f32 %v344, %v350
        %v353 = vmul.f32 %v346, %v350
        %v355 = vrot.slane %v305, 4
        %v357 = vmul.f32 %v351, %v355
        %v359 = vrot.slane %v319, 4
        %v361 = vmul.f32 %v352, %v359
        %v362 = vadd.f32 %v357, %v361
        %v364 = vrot.slane %v333, 4
        %v366 = vmul.f32 %v353, %v364
        %v367 = vadd.f32 %v362, %v366
        %vm368 = vcmask 520196
        %369 = vst.msk [vmem:[%s251 - $0x4] sm:$0x10] %vm368, %v367
        %v371 = vrot.slane %v307, 5
        %v373 = vmul.f32 %v351, %v371
        %v375 = vrot.slane %v321, 5
        %v377 = vmul.f32 %v352, %v375
        %v378 = vadd.f32 %v373, %v377
        %v380 = vrot.slane %v335, 5
        %v382 = vmul.f32 %v353, %v380
        %v383 = vadd.f32 %v378, %v382
        %384 = vst.msk [vmem:[%s251 - $0x3] sm:$0x10] %vm368, %v383
        %v386 = vrot.slane %v308, 6
        %v388 = vmul.f32 %v351, %v386
        %v390 = vrot.slane %v322, 6
        %v392 = vmul.f32 %v352, %v390
        %v393 = vadd.f32 %v388, %v392
        %v395 = vrot.slane %v336, 6
        %v397 = vmul.f32 %v353, %v395
        %v398 = vadd.f32 %v393, %v397
        %399 = vst.msk [vmem:[%s251 - $0x2] sm:$0x10] %vm368, %v398
        %v401 = vrot.slane %v309, 7
        %v403 = vmul.f32 %v351, %v401
        %v405 = vrot.slane %v323, 7
        %v407 = vmul.f32 %v352, %v405
        %v408 = vadd.f32 %v403, %v407
        %v410 = vrot.slane %v337, 7
        %v412 = vmul.f32 %v353, %v410
        %v413 = vadd.f32 %v408, %v412
        %414 = vst.msk [vmem:[%s251 - $0x1] sm:$0x10] %vm368, %v413
        %v415 = vadd.f32 %v340, 0.1
        %416 = vst.msk [vmem:[%s251] sm:$0x10] %vm368, %v415
        %v417 = vlaneseq
        %v418 = vshrl.u32 %v417, 7
        %v419 = vsub.s32 4, %v418
        %v420 = vrot.slane %v351, %v419
        %v421 = vmul.f32 %v420, %v301
        %v422 = vlaneseq
        %v423 = vshrl.u32 %v422, 7
        %v424 = vsub.s32 4, %v423
        %v425 = vrot.slane %v352, %v424
        %v426 = vmul.f32 %v425, %v315
        %v427 = vadd.f32 %v421, %v426
        %v428 = vlaneseq
        %v429 = vshrl.u32 %v428, 7
        %v430 = vsub.s32 4, %v429
        %v431 = vrot.slane %v353, %v430
        %v432 = vmul.f32 %v431, %v329
        %v433 = vadd.f32 %v427, %v432
        %vm434 = vcmask 523269
        %435 = vst.msk [vmem:[%s251] sm:$0xe0] %vm434, %v433
        %v436 = vld [vmem:[%s274] sm:$0xff]
        %v437 = vld [vmem:[%s274 + $0x8] sm:$0xff]
        %v438 = vld [vmem:[%s274 + $0x10] sm:$0xff]
        %v439 = vrcp.pop 4.0
        %v440 = vmul.f32 %v290, %v439
        %v441 = vfloor.f32 %v440
        %v442 = vmul.f32 %v441, 4.0
        %v443 = vsub.f32 %v289, %v442
        %v444 = vxor.u32 %v436, 2147483648
        %v445 = vmul.f32 %v444, 1.442695
        %v446 = vpow.pop %v445
        %v447 = vadd.f32 %v446, 1.0
        %v448 = vrcp.pop %v447
        %v449 = vmul.f32 1.0, %v448
        %v450 = vmul.f32 %v436, 1.442695
        %v451 = vpow.pop %v450
        %v452 = vadd.f32 %v449, %v443
        %v453 = vmul.f32 %v452, 16.0
        %v454 = vadd.f32 %v449, %v441
        %v455 = vmul.f32 %v454, 16.0
        %v456 = vmul.f32 %v451, 16.0
        %v457 = vmul.f32 %v451, 24.0
        %v458 = vxor.u32 %v437, 2147483648
        %v459 = vmul.f32 %v458, 1.442695
        %v460 = vpow.pop %v459
        %v461 = vadd.f32 %v460, 1.0
        %v462 = vrcp.pop %v461
        %v463 = vmul.f32 1.0, %v462
        %v464 = vmul.f32 %v437, 1.442695
        %v465 = vpow.pop %v464
        %v466 = vadd.f32 %v463, %v443
        %v467 = vmul.f32 %v466, 16.0
        %v468 = vadd.f32 %v463, %v441
        %v469 = vmul.f32 %v468, 16.0
        %v470 = vmul.f32 %v465, 24.0
        %v471 = vmul.f32 %v465, 32.0
        %v472 = vxor.u32 %v438, 2147483648
        %v473 = vmul.f32 %v472, 1.442695
        %v474 = vpow.pop %v473
        %v475 = vadd.f32 %v474, 1.0
        %v476 = vrcp.pop %v475
        %v477 = vmul.f32 1.0, %v476
        %v478 = vmul.f32 %v438, 1.442695
        %v479 = vpow.pop %v478
        %v480 = vadd.f32 %v477, %v443
        %v481 = vmul.f32 %v480, 16.0
        %v482 = vadd.f32 %v477, %v441
        %v483 = vmul.f32 %v482, 16.0
        %v484 = vmul.f32 %v479, 32.0
        %v485 = vmul.f32 %v479, 40.0
        %v486 = vmax.f32 %v449, %v463
        %v487 = vmax.f32 %v486, %v477
        %v488 = vsub.f32 %v487, 0.1
        %v489 = vsub.f32 %v449, %v488
        %v490 = vmax.f32 %v489, 0.0
        %v491 = vsub.f32 %v463, %v488
        %v492 = vmax.f32 %v491, 0.0
        %v493 = vsub.f32 %v477, %v488
        %v494 = vmax.f32 %v493, 0.0
        %v495 = vadd.f32 %v490, %v492
        %v496 = vadd.f32 %v495, %v494
        %v497 = vrcp.pop %v496
        %v498 = vmul.f32 1.0, %v497
        %v499 = vmul.f32 %v490, %v498
        %v500 = vmul.f32 %v492, %v498
        %v501 = vmul.f32 %v494, %v498
        %v503 = vrot.slane %v453, 4
        %v505 = vmul.f32 %v499, %v503
        %v507 = vrot.slane %v467, 4
        %v509 = vmul.f32 %v500, %v507
        %v510 = vadd.f32 %v505, %v509
        %v512 = vrot.slane %v481, 4
        %v514 = vmul.f32 %v501, %v512
        %v515 = vadd.f32 %v510, %v514
        %vm516 = vcmask 126980
        %517 = vst.msk [vmem:[%s258 - $0x4] sm:$0x10] %vm516, %v515
        %v519 = vrot.slane %v455, 5
        %v521 = vmul.f32 %v499, %v519
        %v523 = vrot.slane %v469, 5
        %v525 = vmul.f32 %v500, %v523
        %v526 = vadd.f32 %v521, %v525
        %v528 = vrot.slane %v483, 5
        %v530 = vmul.f32 %v501, %v528
        %v531 = vadd.f32 %v526, %v530
        %532 = vst.msk [vmem:[%s258 - $0x3] sm:$0x10] %vm516, %v531
        %v534 = vrot.slane %v456, 6
        %v536 = vmul.f32 %v499, %v534
        %v538 = vrot.slane %v470, 6
        %v540 = vmul.f32 %v500, %v538
        %v541 = vadd.f32 %v536, %v540
        %v543 = vrot.slane %v484, 6
        %v545 = vmul.f32 %v501, %v543
        %v546 = vadd.f32 %v541, %v545
        %547 = vst.msk [vmem:[%s258 - $0x2] sm:$0x10] %vm516, %v546
        %v549 = vrot.slane %v457, 7
        %v551 = vmul.f32 %v499, %v549
        %v553 = vrot.slane %v471, 7
        %v555 = vmul.f32 %v500, %v553
        %v556 = vadd.f32 %v551, %v555
        %v558 = vrot.slane %v485, 7
        %v560 = vmul.f32 %v501, %v558
        %v561 = vadd.f32 %v556, %v560
        %562 = vst.msk [vmem:[%s258 - $0x1] sm:$0x10] %vm516, %v561
        %v563 = vadd.f32 %v488, 0.1
        %564 = vst.msk [vmem:[%s258] sm:$0x10] %vm516, %v563
        %v565 = vlaneseq
        %v566 = vshrl.u32 %v565, 7
        %v567 = vsub.s32 4, %v566
        %v568 = vrot.slane %v499, %v567
        %v569 = vmul.f32 %v568, %v449
        %v570 = vlaneseq
        %v571 = vshrl.u32 %v570, 7
        %v572 = vsub.s32 4, %v571
        %v573 = vrot.slane %v500, %v572
        %v574 = vmul.f32 %v573, %v463
        %v575 = vadd.f32 %v569, %v574
        %v576 = vlaneseq
        %v577 = vshrl.u32 %v576, 7
        %v578 = vsub.s32 4, %v577
        %v579 = vrot.slane %v501, %v578
        %v580 = vmul.f32 %v579, %v477
        %v581 = vadd.f32 %v575, %v580
        %vm582 = vcmask 130053
        %583 = vst.msk [vmem:[%s258] sm:$0xe0] %vm582, %v581
        %v584 = vld [vmem:[%s279] sm:$0xff]
        %v585 = vld [vmem:[%s279 + $0x8] sm:$0xff]
        %v586 = vld [vmem:[%s279 + $0x10] sm:$0xff]
        %v587 = vrcp.pop 2.0
        %v588 = vmul.f32 %v290, %v587
        %v589 = vfloor.f32 %v588
        %v590 = vmul.f32 %v589, 2.0
        %v591 = vsub.f32 %v289, %v590
        %v592 = vxor.u32 %v584, 2147483648
        %v593 = vmul.f32 %v592, 1.442695
        %v594 = vpow.pop %v593
        %v595 = vadd.f32 %v594, 1.0
        %v596 = vrcp.pop %v595
        %v597 = vmul.f32 1.0, %v596
        %v598 = vmul.f32 %v584, 1.442695
        %v599 = vpow.pop %v598
        %v600 = vadd.f32 %v597, %v591
        %v601 = vmul.f32 %v600, 32.0
        %v602 = vadd.f32 %v597, %v589
        %v603 = vmul.f32 %v602, 32.0
        %v604 = vmul.f32 %v599, 40.0
        %v605 = vmul.f32 %v599, 48.0
        %v606 = vxor.u32 %v585, 2147483648
        %v607 = vmul.f32 %v606, 1.442695
        %v608 = vpow.pop %v607
        %v609 = vadd.f32 %v608, 1.0
        %v610 = vrcp.pop %v609
        %v611 = vmul.f32 1.0, %v610
        %v612 = vmul.f32 %v585, 1.442695
        %v613 = vpow.pop %v612
        %v614 = vadd.f32 %v611, %v591
        %v615 = vmul.f32 %v614, 32.0
        %v616 = vadd.f32 %v611, %v589
        %v617 = vmul.f32 %v616, 32.0
        %v618 = vmul.f32 %v613, 48.0
        %v619 = vmul.f32 %v613, 56.0
        %v620 = vxor.u32 %v586, 2147483648
        %v621 = vmul.f32 %v620, 1.442695
        %v622 = vpow.pop %v621
        %v623 = vadd.f32 %v622, 1.0
        %v624 = vrcp.pop %v623
        %v625 = vmul.f32 1.0, %v624
        %v626 = vmul.f32 %v586, 1.442695
        %v627 = vpow.pop %v626
        %v628 = vadd.f32 %v625, %v591
        %v629 = vmul.f32 %v628, 32.0
        %v630 = vadd.f32 %v625, %v589
        %v631 = vmul.f32 %v630, 32.0
        %v632 = vmul.f32 %v627, 56.0
        %v633 = vmul.f32 %v627, 60.0
        %v634 = vmax.f32 %v597, %v611
        %v635 = vmax.f32 %v634, %v625
        %v636 = vsub.f32 %v635, 0.1
        %v637 = vsub.f32 %v597, %v636
        %v638 = vmax.f32 %v637, 0.0
        %v639 = vsub.f32 %v611, %v636
        %v640 = vmax.f32 %v639, 0.0
        %v641 = vsub.f32 %v625, %v636
        %v642 = vmax.f32 %v641, 0.0
        %v643 = vadd.f32 %v638, %v640
        %v644 = vadd.f32 %v643, %v642
        %v645 = vrcp.pop %v644
        %v646 = vmul.f32 1.0, %v645
        %v647 = vmul.f32 %v638, %v646
        %v648 = vmul.f32 %v640, %v646
        %v649 = vmul.f32 %v642, %v646
        %v651 = vrot.slane %v601, 4
        %v653 = vmul.f32 %v647, %v651
        %v655 = vrot.slane %v615, 4
        %v657 = vmul.f32 %v648, %v655
        %v658 = vadd.f32 %v653, %v657
        %v660 = vrot.slane %v629, 4
        %v662 = vmul.f32 %v649, %v660
        %v663 = vadd.f32 %v658, %v662
        %vm664 = vcmask 28676
        %665 = vst.msk [vmem:[%s283 - $0x4] sm:$0x10] %vm664, %v663
        %v667 = vrot.slane %v603, 5
        %v669 = vmul.f32 %v647, %v667
        %v671 = vrot.slane %v617, 5
        %v673 = vmul.f32 %v648, %v671
        %v674 = vadd.f32 %v669, %v673
        %v676 = vrot.slane %v631, 5
        %v678 = vmul.f32 %v649, %v676
        %v679 = vadd.f32 %v674, %v678
        %680 = vst.msk [vmem:[%s283 - $0x3] sm:$0x10] %vm664, %v679
        %v682 = vrot.slane %v604, 6
        %v684 = vmul.f32 %v647, %v682
        %v686 = vrot.slane %v618, 6
        %v688 = vmul.f32 %v648, %v686
        %v689 = vadd.f32 %v684, %v688
        %v691 = vrot.slane %v632, 6
        %v693 = vmul.f32 %v649, %v691
        %v694 = vadd.f32 %v689, %v693
        %695 = vst.msk [vmem:[%s283 - $0x2] sm:$0x10] %vm664, %v694
        %v697 = vrot.slane %v605, 7
        %v699 = vmul.f32 %v647, %v697
        %v701 = vrot.slane %v619, 7
        %v703 = vmul.f32 %v648, %v701
        %v704 = vadd.f32 %v699, %v703
        %v706 = vrot.slane %v633, 7
        %v708 = vmul.f32 %v649, %v706
        %v709 = vadd.f32 %v704, %v708
        %710 = vst.msk [vmem:[%s283 - $0x1] sm:$0x10] %vm664, %v709
        %v711 = vadd.f32 %v636, 0.1
        %712 = vst.msk [vmem:[%s283] sm:$0x10] %vm664, %v711
        %v713 = vlaneseq
        %v714 = vshrl.u32 %v713, 7
        %v715 = vsub.s32 4, %v714
        %v716 = vrot.slane %v647, %v715
        %v717 = vmul.f32 %v716, %v597
        %v718 = vlaneseq
        %v719 = vshrl.u32 %v718, 7
        %v720 = vsub.s32 4, %v719
        %v721 = vrot.slane %v648, %v720
        %v722 = vmul.f32 %v721, %v611
        %v723 = vadd.f32 %v717, %v722
        %v724 = vlaneseq
        %v725 = vshrl.u32 %v724, 7
        %v726 = vsub.s32 4, %v725
        %v727 = vrot.slane %v649, %v726
        %v728 = vmul.f32 %v727, %v625
        %v729 = vadd.f32 %v723, %v728
        %vm730 = vcmask 31749
        %731 = vst.msk [vmem:[%s283] sm:$0xe0] %vm730, %v729
        %s732 = sand.u32 %s109, 1
        %s733 = scalar_lea.sflag [#allocation3], %s732
        %s734 = sand.u32 %s109, 1
        %s735 = smul.addr %s734, 8
        %s736 = scalar_lea.vmem [#allocation2], %s735
        %s737 = sand.u32 %s135, 1
        %s738 = scalar_lea.sflag [#allocation5], %s737
        %s739 = sand.u32 %s135, 1
        %s740 = smul.addr %s739, 8
        %s741 = scalar_lea.vmem [#allocation4], %s740
        %p742 = scmp.lt.s32.totalorder %s23, 1
        %s743 = scalar_select %p742, %s23, 1
        %s744 = smul.addr %s743, 8
        %s745 = scalar_lea.vmem %s5, %s744
        // Predicated region
        $region33: #{tpu_custom_call.1} parent=31 // pred_check
          %p746 = pneg %p119
        $region34: #{tpu_custom_call.1} parent=31 // pred_check_branch
          %748 = sbr.rel (%p746) target = $region36
        $region35: #{tpu_custom_call.1} parent=31 // pred_region
          %s750 = ssub.s32 128, 128
          %751 = vsyncadd %s733, %s750
          %s752 = smul.addr %s23, 128
          %s753 = scalar_lea.hbm %s3, %s752
          %s755 = sshll.u32 %s736, 4
          %s756 = int_to_ptr.vmem [resolvable:$true] %s755
          %758 = dma.vmem_to_hbm [thread:$0]  %s756, 128, %s753, %s733
        $region36: #{tpu_custom_call.1} parent=31 // pred_fallthru
          _
        // Predicated region
        $region37: #{tpu_custom_call.1} parent=31 // pred_check
          %p759 = pneg %p145
        $region38: #{tpu_custom_call.1} parent=31 // pred_check_branch
          %761 = sbr.rel (%p759) target = $region40
        $region39: #{tpu_custom_call.1} parent=31 // pred_region
          %s763 = ssub.s32 128, 128
          %764 = vsyncadd %s738, %s763
          %s765 = smul.addr %s23, 128
          %s766 = scalar_lea.hbm %s4, %s765
          %s768 = sshll.u32 %s741, 4
          %s769 = int_to_ptr.vmem [resolvable:$true] %s768
          %771 = dma.vmem_to_hbm [thread:$0]  %s769, 128, %s766, %s738
        $region40: #{tpu_custom_call.1} parent=31 // pred_fallthru
          _
        // Predicated region
        $region41: #{tpu_custom_call.1} parent=31 // pred_check
          %p772 = pneg %p171
        $region42: #{tpu_custom_call.1} parent=31 // pred_check_branch
          %774 = sbr.rel (%p772) target = $region44
        $region43: #{tpu_custom_call.1} parent=31 // pred_region
          _
        $region44: #{tpu_custom_call.1} parent=31 // pred_fallthru
          _
      $region32: #{tpu_custom_call.1} parent=5 // pred_fallthru
        _
      %p775 = scmp.le.s32.totalorder 2, %s18
      // Predicated region
      $region45: #{tpu_custom_call.1} parent=5 // pred_check
        %p776 = pneg %p775
      $region46: #{tpu_custom_call.1} parent=5 // pred_check_branch
        %778 = sbr.rel (%p776) target = $region48
      $region47: #{tpu_custom_call.1} parent=5 // pred_region
        %s779 = ssub.s32 %s18, 2
        // Predicated region
        $region49: #{tpu_custom_call.1} parent=47 // pred_check
          %p780 = pneg %p125
        $region50: #{tpu_custom_call.1} parent=47 // pred_check_branch
          %782 = sbr.rel (%p780) target = $region52
        $region51: #{tpu_custom_call.1} parent=47 // pred_region
          %s783 = sand.u32 %s110, 1
          %s784 = scalar_lea.sflag [#allocation3], %s783
          %s785 = sand.u32 %s110, 1
          %s786 = smul.addr %s785, 8
          %s787 = scalar_lea.vmem [#allocation2], %s786
          %788 = dma.done %s784, 128
        $region52: #{tpu_custom_call.1} parent=47 // pred_fallthru
          _
        // Predicated region
        $region53: #{tpu_custom_call.1} parent=47 // pred_check
          %p789 = pneg %p151
        $region54: #{tpu_custom_call.1} parent=47 // pred_check_branch
          %791 = sbr.rel (%p789) target = $region56
        $region55: #{tpu_custom_call.1} parent=47 // pred_region
          %s792 = sand.u32 %s136, 1
          %s793 = scalar_lea.sflag [#allocation5], %s792
          %s794 = sand.u32 %s136, 1
          %s795 = smul.addr %s794, 8
          %s796 = scalar_lea.vmem [#allocation4], %s795
          %797 = dma.done %s793, 128
        $region56: #{tpu_custom_call.1} parent=47 // pred_fallthru
          _
        // Predicated region
        $region57: #{tpu_custom_call.1} parent=47 // pred_check
          %p798 = pneg %p177
        $region58: #{tpu_custom_call.1} parent=47 // pred_check_branch
          %800 = sbr.rel (%p798) target = $region60
        $region59: #{tpu_custom_call.1} parent=47 // pred_region
          %p801 = scmp.lt.s32.totalorder %s24, 1
          %s802 = scalar_select %p801, %s24, 1
          %s803 = smul.addr %s802, 8
          %s804 = scalar_lea.vmem %s5, %s803
        $region60: #{tpu_custom_call.1} parent=47 // pred_fallthru
          _
      $region48: #{tpu_custom_call.1} parent=5 // pred_fallthru
        _
    $region6: #{tpu_custom_call.1} parent=1 // loop_footer
      %s22 = sadd.s32 1, %s18
    $region7: #{tpu_custom_call.1} parent=1 // loop_footer_branch
      %17 = sbr.rel target = $region3
    $region8: #{tpu_custom_call.1} parent=1 // loop_exit
      _
    %805 = vsyncpa [#allocation3], 1
    %s806 = scalar_lea.sflag [#allocation3], 1
    %807 = vsyncpa %s806, 1
    %808 = vsyncpa [#allocation5], 1
    %s809 = scalar_lea.sflag [#allocation5], 1
    %810 = vsyncpa %s809, 1

</llo_original>
